<compile_context>
chip_gen: v5e
topology: v5e:2x2
jax: 0.10.0
libtpu: 0.0.40
codegen_flags: <defaults>
</compile_context>

<pallas_src>
import numpy as np
import jax
import jax.numpy as jnp
from jax import lax
from jax.experimental import pallas as pl
from jax.experimental.pallas import tpu as pltpu


def _elu(x):
    # torch.nn.functional.elu, alpha=1
    return jnp.where(x > 0.0, x, jnp.exp(x) - 1.0)


# ---------------- fused Pallas kernel ----------------

def _fused_encoder_kernel(u3_ref, w_ref, b_ref, lw_ref, lb_ref, out_ref,
                          pad_ref, hbuf_ref):
    # u3_ref : (3, Bt, L, K)        stacked branch inputs (u, u[p1], u[p2]) for this tile
    # w_ref  : (3, nl, ksz*Cu, Cu)  conv weights (layer-0 zero-padded K->Cu)
    # b_ref  : (3, nl, 1, Cu)       conv biases
    # lw_ref : (3*Cu, 3)            block-diagonal fused linear weight
    # lb_ref : (1, 3)               fused linear bias
    # out_ref: (B, L, 3)            VMEM-resident across the whole grid
    # pad_ref: (Bt*Lp, Cu)          per-batch padded activation buffer (scratch)
    # hbuf_ref:(Bt*L, 3*Cu)         lane-packed final conv activations of the 3 branches
    n_br, Bt, L, K = u3_ref.shape
    _, nl, ksz_cu, Cu = w_ref.shape
    ksz = ksz_cu // Cu
    pad = ksz // 2
    Lp = L + 2 * pad
    N = Bt * Lp - 2 * pad            # rows of conv output computed per matmul
    step = pl.program_id(0)

    # Zero the padded buffer: the never-written halo rows between/around batch segments
    # provide the "same" conv padding for every layer of every branch.
    pad_ref[...] = jnp.zeros_like(pad_ref)

    for br in range(n_br):
        # Place this branch's input into the first K channels of each batch interior.
        for b in range(Bt):
            pad_ref[b * Lp + pad: b * Lp + pad + L, 0:K] = u3_ref[br, b]

        h = None
        for l in range(nl):
            # im2col: lane-concatenate the ksz shifted views -> one MXU matmul.
            col = jnp.concatenate(
                [pad_ref[t: t + N, :] for t in range(ksz)], axis=1)       # (N, ksz*Cu)
            h = jnp.dot(col, w_ref[br, l], preferred_element_type=jnp.float32)
            h = _elu(h + b_ref[br, l])                                     # (N, Cu)
            if l + 1 < nl:
                # Write interiors back for the next conv layer (halos stay zero).
                for b in range(Bt):
                    pad_ref[b * Lp + pad: b * Lp + pad + L, :] = h[b * Lp: b * Lp + L, :]

        # Stash the final conv activation (valid interior rows only), lane-packed by branch.
        for b in range(Bt):
            hbuf_ref[b * L:(b + 1) * L, br * Cu:(br + 1) * Cu] = h[b * Lp: b * Lp + L, :]

    # Fused Linear(Cu, 1) + ELU for all three branches via block-diagonal weight
    # -> directly the lane-packed (Bt*L, 3) output of this tile.
    y = _elu(jnp.dot(hbuf_ref[...], lw_ref[...],
                     preferred_element_type=jnp.float32) + lb_ref[...])

    for b in range(Bt):
        out_ref[step * Bt + b] = y[b * L:(b + 1) * L, :]

    # Fused power constraint: the full (B, L, 3) output is VMEM-resident; on the last
    # (sequential) grid step normalize it in place:  (x - mean) / std,  std with ddof=1.
    @pl.when(step == pl.num_programs(0) - 1)
    def _():
        xt = out_ref[...]
        n = xt.shape[0] * xt.shape[1] * xt.shape[2]
        mean = jnp.sum(xt) / n
        c = xt - mean
        var = jnp.sum(c * c) / (n - 1)
        out_ref[...] = c * lax.rsqrt(var)


# ---------------- wrapper / plumbing ----------------

def _largest_divisor_leq(n, cap):
    for d in range(min(n, cap), 0, -1):
        if n % d == 0:
            return d
    return 1


def pack_encoder_params(params):
    # Stack the 3 branches into uniform arrays consumed by the fused kernel.
    w_layers, b_layers, lws, lbs = [], [], [], []
    for br in (1, 2, 3):
        ws, bs = params[f"cnn{br}"]
        lw, lb = params[f"lin{br}"]
        ksz, _, Cu = ws[0].shape
        pw, pb = [], []
        for w, b in zip(ws, bs):
            cin = w.shape[1]
            assert cin <= Cu
            if cin < Cu:
                # zero-pad layer-0 input channels so every layer is (ksz*Cu, Cu)
                w = jnp.pad(w, ((0, 0), (0, Cu - cin), (0, 0)))
            pw.append(w.reshape(ksz * Cu, Cu))
            pb.append(b.reshape(1, Cu))
        w_layers.append(jnp.stack(pw, 0))
        b_layers.append(jnp.stack(pb, 0))
        lws.append(lw)
        lbs.append(lb)
    w_stack = jnp.stack(w_layers, 0)                      # (3, nl, ksz*Cu, Cu)
    b_stack = jnp.stack(b_layers, 0)                      # (3, nl, 1, Cu)
    Cu = lws[0].shape[0]
    lw_blk = jnp.zeros((3 * Cu, 3), jnp.float32)          # block-diagonal linear weight
    for j, lw in enumerate(lws):
        lw_blk = lw_blk.at[j * Cu:(j + 1) * Cu, j:j + 1].set(lw)
    lb_cat = jnp.concatenate(lbs).reshape(1, 3)
    return w_stack, b_stack, lw_blk, lb_cat


def enc_forward(x, params, p1, p2):
    B, L, K = x.shape
    u = 2.0 * x - 1.0
    # Interleavers: tiny gathers on the raw input (glue); stacked so one fused kernel
    # handles all three branches.
    u_stack = jnp.stack([u, jnp.take(u, p1, axis=1), jnp.take(u, p2, axis=1)], axis=0)

    w_stack, b_stack, lw_blk, lb_cat = pack_encoder_params(params)
    _, nl, ksz_cu, Cu = w_stack.shape
    ksz = ksz_cu // Cu
    Lp = L + 2 * (ksz // 2)
    assert K <= Cu

    Bt = _largest_divisor_leq(B, 8)    # pack several batch rows per step into the matmul M dim
    nbt = B // Bt

    return pl.pallas_call(
        _fused_encoder_kernel,
        out_shape=jax.ShapeDtypeStruct((B, L, 3), jnp.float32),
        grid=(nbt,),
        in_specs=[
            pl.BlockSpec((3, Bt, L, K), lambda i: (0, i, 0, 0)),
            pl.BlockSpec((3, nl, ksz_cu, Cu), lambda i: (0, 0, 0, 0)),
            pl.BlockSpec((3, nl, 1, Cu), lambda i: (0, 0, 0, 0)),
            pl.BlockSpec((3 * Cu, 3), lambda i: (0, 0)),
            pl.BlockSpec((1, 3), lambda i: (0, 0)),
        ],
        # Output block == full array for every step -> stays VMEM-resident so the fused
        # power constraint can normalize it on the last step (hence "arbitrary" grid).
        out_specs=pl.BlockSpec((B, L, 3), lambda i: (0, 0, 0)),
        scratch_shapes=[
            pltpu.VMEM((Bt * Lp, Cu), jnp.float32),
            pltpu.VMEM((Bt * L, 3 * Cu), jnp.float32),
        ],
        compiler_params=pltpu.CompilerParams(
            dimension_semantics=("arbitrary",)),
    )(u_stack, w_stack, b_stack, lw_blk, lb_cat)


# ---------------- params & pure-JAX reference ----------------

def init_params(key, args):
    K, Cu = args["code_rate_k"], args["enc_num_unit"]
    ksz, nl = args["dec_kernel_size"], args["enc_num_layer"]
    params = {}
    for branch in (1, 2, 3):
        ws, bs = [], []
        cin = K
        for _ in range(nl):
            key, k1, k2 = jax.random.split(key, 3)
            ws.append(0.3 * jax.random.normal(k1, (ksz, cin, Cu), jnp.float32))
            bs.append(0.1 * jax.random.normal(k2, (Cu,), jnp.float32))
            cin = Cu
        key, k1, k2 = jax.random.split(key, 3)
        lw = 0.3 * jax.random.normal(k1, (Cu, 1), jnp.float32)
        lb = 0.1 * jax.random.normal(k2, (1,), jnp.float32)
        params[f"cnn{branch}"] = (ws, bs)
        params[f"lin{branch}"] = (lw, lb)
    return params


def ref_forward(x, params, p1, p2):
    # pure-JAX reference of the PyTorch forward
    u = 2.0 * x - 1.0

    def conv(h, w, b):
        pad = w.shape[0] // 2
        hp = jnp.pad(h, ((0, 0), (pad, pad), (0, 0)))
        out = sum(jnp.einsum("blc,cd->bld", hp[:, t:t + h.shape[1], :], w[t],
                             precision=lax.Precision.HIGHEST)
                  for t in range(w.shape[0])) + b
        return jnp.where(out > 0, out, jnp.exp(out) - 1.0)

    def branch(inp, ws, bs, lw, lb):
        h = inp
        for w, b in zip(ws, bs):
            h = conv(h, w, b)
        y = jnp.einsum("blc,cd->bld", h, lw, precision=lax.Precision.HIGHEST) + lb
        return jnp.where(y > 0, y, jnp.exp(y) - 1.0)

    x_sys = branch(u, *params["cnn1"], *params["lin1"])
    x_p1 = branch(jnp.take(u, p1, axis=1), *params["cnn2"], *params["lin2"])
    x_p2 = branch(jnp.take(u, p2, axis=1), *params["cnn3"], *params["lin3"])
    x_tx = jnp.concatenate([x_sys, x_p1, x_p2], axis=2)
    m = jnp.mean(x_tx)
    s = jnp.std(x_tx, ddof=1)
    return (x_tx - m) / s


if __name__ == "__main__":
    args = dict(code_rate_k=1, enc_num_unit=32, enc_num_layer=2, dec_kernel_size=5)
    B, L = 2, 16

    key = jax.random.PRNGKey(0)
    key, kx, kp1, kp2, kw = jax.random.split(key, 5)
    x = jax.random.bernoulli(kx, 0.5, (B, L, args["code_rate_k"])).astype(jnp.float32)
    p_array1 = jax.random.permutation(kp1, L)
    p_array2 = jax.random.permutation(kp2, L)
    params = init_params(kw, args)

    codes = jax.jit(enc_forward)(x, params, p_array1, p_array2)
    codes = jax.block_until_ready(codes)

    ref = ref_forward(x, params, p_array1, p_array2)
    np.testing.assert_allclose(np.asarray(codes), np.asarray(ref), rtol=1e-3, atol=1e-3)
    assert codes.shape == (B, L, 3)
    print("KERNEL_OK")
</pallas_src>

<mosaic_0001>
module attributes {stable_mosaic.version = 11 : i64} {
  func.func @_fused_encoder_kernel(%arg0: i32, %arg1: memref<3x2x16x1xf32, #tpu.memory_space<vmem>>, %arg2: memref<3x2x160x32xf32, #tpu.memory_space<vmem>>, %arg3: memref<3x2x1x32xf32, #tpu.memory_space<vmem>>, %arg4: memref<96x3xf32, #tpu.memory_space<vmem>>, %arg5: memref<1x3xf32, #tpu.memory_space<vmem>>, %arg6: memref<2x16x3xf32, #tpu.memory_space<vmem>>, %arg7: memref<40x32xf32, #tpu.memory_space<vmem>>, %arg8: memref<32x96xf32, #tpu.memory_space<vmem>>) attributes {dimension_semantics = [#tpu.dimension_semantics<arbitrary>], iteration_bounds = array<i64: 1>, scalar_prefetch = 0 : i64, scratch_operands = 2 : i64, tpu.core_type = #tpu.core_type<tc>, window_params = [{transform_indices = @transform_0, window_bounds = array<i64: 3, 2, 16, 1>}, {pipeline_mode = #tpu.pipeline_mode<synchronous>, transform_indices = @transform_1, window_bounds = array<i64: 3, 2, 160, 32>}, {pipeline_mode = #tpu.pipeline_mode<synchronous>, transform_indices = @transform_2, window_bounds = array<i64: 3, 2, 1, 32>}, {pipeline_mode = #tpu.pipeline_mode<synchronous>, transform_indices = @transform_3, window_bounds = array<i64: 96, 3>}, {pipeline_mode = #tpu.pipeline_mode<synchronous>, transform_indices = @transform_4, window_bounds = array<i64: 1, 3>}, {pipeline_mode = #tpu.pipeline_mode<synchronous>, transform_indices = @transform_5, window_bounds = array<i64: 2, 16, 3>}]} {
    %cst = arith.constant 0.000000e+00 : f32
    %0 = vector.broadcast %cst : f32 to vector<40x32xf32>
    %c0 = arith.constant 0 : index
    %c0_0 = arith.constant 0 : index
    %1 = vector.load %arg7[%c0, %c0_0] : memref<40x32xf32, #tpu.memory_space<vmem>>, vector<40x32xf32>
    tpu.vector_store %arg7[%c0, %c0_0], %0 {strides = array<i32>} : memref<40x32xf32, #tpu.memory_space<vmem>>, vector<40x32xf32>,
    %c0_1 = arith.constant 0 : index
    %c0_2 = arith.constant 0 : index
    %c0_3 = arith.constant 0 : index
    %c0_4 = arith.constant 0 : index
    %2 = vector.load %arg1[%c0_1, %c0_2, %c0_3, %c0_4] : memref<3x2x16x1xf32, #tpu.memory_space<vmem>>, vector<1x1x16x1xf32>
    %3 = vector.shape_cast %2 : vector<1x1x16x1xf32> to vector<16x1xf32>
    %c2 = arith.constant 2 : index
    %c0_5 = arith.constant 0 : index
    %4 = vector.load %arg7[%c2, %c0_5] : memref<40x32xf32, #tpu.memory_space<vmem>>, vector<16x1xf32>
    tpu.vector_store %arg7[%c2, %c0_5], %3 {strides = array<i32>} : memref<40x32xf32, #tpu.memory_space<vmem>>, vector<16x1xf32>,
    %c0_6 = arith.constant 0 : index
    %c1 = arith.constant 1 : index
    %c0_7 = arith.constant 0 : index
    %c0_8 = arith.constant 0 : index
    %5 = vector.load %arg1[%c0_6, %c1, %c0_7, %c0_8] : memref<3x2x16x1xf32, #tpu.memory_space<vmem>>, vector<1x1x16x1xf32>
    %6 = vector.shape_cast %5 : vector<1x1x16x1xf32> to vector<16x1xf32>
    %c22 = arith.constant 22 : index
    %c0_9 = arith.constant 0 : index
    %7 = vector.load %arg7[%c22, %c0_9] : memref<40x32xf32, #tpu.memory_space<vmem>>, vector<16x1xf32>
    tpu.vector_store %arg7[%c22, %c0_9], %6 {strides = array<i32>} : memref<40x32xf32, #tpu.memory_space<vmem>>, vector<16x1xf32>,
    %c0_10 = arith.constant 0 : index
    %c0_11 = arith.constant 0 : index
    %8 = vector.load %arg7[%c0_10, %c0_11] : memref<40x32xf32, #tpu.memory_space<vmem>>, vector<36x32xf32>
    %c1_12 = arith.constant 1 : index
    %c0_13 = arith.constant 0 : index
    %9 = vector.load %arg7[%c1_12, %c0_13] : memref<40x32xf32, #tpu.memory_space<vmem>>, vector<36x32xf32>
    %c2_14 = arith.constant 2 : index
    %c0_15 = arith.constant 0 : index
    %10 = vector.load %arg7[%c2_14, %c0_15] : memref<40x32xf32, #tpu.memory_space<vmem>>, vector<36x32xf32>
    %c3 = arith.constant 3 : index
    %c0_16 = arith.constant 0 : index
    %11 = vector.load %arg7[%c3, %c0_16] : memref<40x32xf32, #tpu.memory_space<vmem>>, vector<36x32xf32>
    %c4 = arith.constant 4 : index
    %c0_17 = arith.constant 0 : index
    %12 = vector.load %arg7[%c4, %c0_17] : memref<40x32xf32, #tpu.memory_space<vmem>>, vector<36x32xf32>
    %13 = tpu.concatenate %8, %9, %10, %11, %12 in 1 : vector<36x32xf32>, vector<36x32xf32>, vector<36x32xf32>, vector<36x32xf32>, vector<36x32xf32> -> vector<36x160xf32>
    %c0_18 = arith.constant 0 : index
    %c0_19 = arith.constant 0 : index
    %c0_20 = arith.constant 0 : index
    %c0_21 = arith.constant 0 : index
    %14 = vector.load %arg2[%c0_18, %c0_19, %c0_20, %c0_21] : memref<3x2x160x32xf32, #tpu.memory_space<vmem>>, vector<1x1x160x32xf32>
    %15 = vector.shape_cast %14 : vector<1x1x160x32xf32> to vector<160x32xf32>
    %cst_22 = arith.constant dense<0.000000e+00> : vector<36x32xf32>
    %16 = tpu.matmul %13, %15, %cst_22 {dimension_numbers = #tpu.dot_dimension_numbers<[1], [0], [0], [1], [0, 0, 1, 1], [], []>} : vector<36x160xf32>, vector<160x32xf32>, vector<36x32xf32> -> vector<36x32xf32>
    %c0_23 = arith.constant 0 : index
    %c0_24 = arith.constant 0 : index
    %c0_25 = arith.constant 0 : index
    %c0_26 = arith.constant 0 : index
    %17 = vector.load %arg3[%c0_23, %c0_24, %c0_25, %c0_26] : memref<3x2x1x32xf32, #tpu.memory_space<vmem>>, vector<1x1x1x32xf32>
    %18 = vector.shape_cast %17 : vector<1x1x1x32xf32> to vector<1x32xf32>
    %19 = vector.broadcast %18 : vector<1x32xf32> to vector<36x32xf32>
    %20 = arith.addf %16, %19 : vector<36x32xf32>
    %cst_27 = arith.constant 0.000000e+00 : f32
    %21 = vector.broadcast %cst_27 : f32 to vector<36x32xf32>
    %22 = arith.cmpf ogt, %20, %21 : vector<36x32xf32>
    %23 = math.exp %20 : vector<36x32xf32>
    %cst_28 = arith.constant 1.000000e+00 : f32
    %24 = vector.broadcast %cst_28 : f32 to vector<36x32xf32>
    %25 = arith.subf %23, %24 : vector<36x32xf32>
    %26 = arith.select %22, %20, %25 : vector<36x32xi1>, vector<36x32xf32>
    %27 = vector.extract_strided_slice %26 {offsets = [0, 0], sizes = [16, 32], strides = [1, 1]} : vector<36x32xf32> to vector<16x32xf32>
    %c2_29 = arith.constant 2 : index
    %c0_30 = arith.constant 0 : index
    %28 = vector.load %arg7[%c2_29, %c0_30] : memref<40x32xf32, #tpu.memory_space<vmem>>, vector<16x32xf32>
    tpu.vector_store %arg7[%c2_29, %c0_30], %27 {strides = array<i32>} : memref<40x32xf32, #tpu.memory_space<vmem>>, vector<16x32xf32>,
    %29 = vector.extract_strided_slice %26 {offsets = [20, 0], sizes = [16, 32], strides = [1, 1]} : vector<36x32xf32> to vector<16x32xf32>
    %c22_31 = arith.constant 22 : index
    %c0_32 = arith.constant 0 : index
    %30 = vector.load %arg7[%c22_31, %c0_32] : memref<40x32xf32, #tpu.memory_space<vmem>>, vector<16x32xf32>
    tpu.vector_store %arg7[%c22_31, %c0_32], %29 {strides = array<i32>} : memref<40x32xf32, #tpu.memory_space<vmem>>, vector<16x32xf32>,
    %c0_33 = arith.constant 0 : index
    %c0_34 = arith.constant 0 : index
    %31 = vector.load %arg7[%c0_33, %c0_34] : memref<40x32xf32, #tpu.memory_space<vmem>>, vector<36x32xf32>
    %c1_35 = arith.constant 1 : index
    %c0_36 = arith.constant 0 : index
    %32 = vector.load %arg7[%c1_35, %c0_36] : memref<40x32xf32, #tpu.memory_space<vmem>>, vector<36x32xf32>
    %c2_37 = arith.constant 2 : index
    %c0_38 = arith.constant 0 : index
    %33 = vector.load %arg7[%c2_37, %c0_38] : memref<40x32xf32, #tpu.memory_space<vmem>>, vector<36x32xf32>
    %c3_39 = arith.constant 3 : index
    %c0_40 = arith.constant 0 : index
    %34 = vector.load %arg7[%c3_39, %c0_40] : memref<40x32xf32, #tpu.memory_space<vmem>>, vector<36x32xf32>
    %c4_41 = arith.constant 4 : index
    %c0_42 = arith.constant 0 : index
    %35 = vector.load %arg7[%c4_41, %c0_42] : memref<40x32xf32, #tpu.memory_space<vmem>>, vector<36x32xf32>
    %36 = tpu.concatenate %31, %32, %33, %34, %35 in 1 : vector<36x32xf32>, vector<36x32xf32>, vector<36x32xf32>, vector<36x32xf32>, vector<36x32xf32> -> vector<36x160xf32>
    %c0_43 = arith.constant 0 : index
    %c1_44 = arith.constant 1 : index
    %c0_45 = arith.constant 0 : index
    %c0_46 = arith.constant 0 : index
    %37 = vector.load %arg2[%c0_43, %c1_44, %c0_45, %c0_46] : memref<3x2x160x32xf32, #tpu.memory_space<vmem>>, vector<1x1x160x32xf32>
    %38 = vector.shape_cast %37 : vector<1x1x160x32xf32> to vector<160x32xf32>
    %cst_47 = arith.constant dense<0.000000e+00> : vector<36x32xf32>
    %39 = tpu.matmul %36, %38, %cst_47 {dimension_numbers = #tpu.dot_dimension_numbers<[1], [0], [0], [1], [0, 0, 1, 1], [], []>} : vector<36x160xf32>, vector<160x32xf32>, vector<36x32xf32> -> vector<36x32xf32>
    %c0_48 = arith.constant 0 : index
    %c1_49 = arith.constant 1 : index
    %c0_50 = arith.constant 0 : index
    %c0_51 = arith.constant 0 : index
    %40 = vector.load %arg3[%c0_48, %c1_49, %c0_50, %c0_51] : memref<3x2x1x32xf32, #tpu.memory_space<vmem>>, vector<1x1x1x32xf32>
    %41 = vector.shape_cast %40 : vector<1x1x1x32xf32> to vector<1x32xf32>
    %42 = vector.broadcast %41 : vector<1x32xf32> to vector<36x32xf32>
    %43 = arith.addf %39, %42 : vector<36x32xf32>
    %cst_52 = arith.constant 0.000000e+00 : f32
    %44 = vector.broadcast %cst_52 : f32 to vector<36x32xf32>
    %45 = arith.cmpf ogt, %43, %44 : vector<36x32xf32>
    %46 = math.exp %43 : vector<36x32xf32>
    %cst_53 = arith.constant 1.000000e+00 : f32
    %47 = vector.broadcast %cst_53 : f32 to vector<36x32xf32>
    %48 = arith.subf %46, %47 : vector<36x32xf32>
    %49 = arith.select %45, %43, %48 : vector<36x32xi1>, vector<36x32xf32>
    %50 = vector.extract_strided_slice %49 {offsets = [0, 0], sizes = [16, 32], strides = [1, 1]} : vector<36x32xf32> to vector<16x32xf32>
    %c0_54 = arith.constant 0 : index
    %c0_55 = arith.constant 0 : index
    %51 = vector.load %arg8[%c0_54, %c0_55] : memref<32x96xf32, #tpu.memory_space<vmem>>, vector<16x32xf32>
    tpu.vector_store %arg8[%c0_54, %c0_55], %50 {strides = array<i32>} : memref<32x96xf32, #tpu.memory_space<vmem>>, vector<16x32xf32>,
    %52 = vector.extract_strided_slice %49 {offsets = [20, 0], sizes = [16, 32], strides = [1, 1]} : vector<36x32xf32> to vector<16x32xf32>
    %c16 = arith.constant 16 : index
    %c0_56 = arith.constant 0 : index
    %53 = vector.load %arg8[%c16, %c0_56] : memref<32x96xf32, #tpu.memory_space<vmem>>, vector<16x32xf32>
    tpu.vector_store %arg8[%c16, %c0_56], %52 {strides = array<i32>} : memref<32x96xf32, #tpu.memory_space<vmem>>, vector<16x32xf32>,
    %c1_57 = arith.constant 1 : index
    %c0_58 = arith.constant 0 : index
    %c0_59 = arith.constant 0 : index
    %c0_60 = arith.constant 0 : index
    %54 = vector.load %arg1[%c1_57, %c0_58, %c0_59, %c0_60] : memref<3x2x16x1xf32, #tpu.memory_space<vmem>>, vector<1x1x16x1xf32>
    %55 = vector.shape_cast %54 : vector<1x1x16x1xf32> to vector<16x1xf32>
    %c2_61 = arith.constant 2 : index
    %c0_62 = arith.constant 0 : index
    %56 = vector.load %arg7[%c2_61, %c0_62] : memref<40x32xf32, #tpu.memory_space<vmem>>, vector<16x1xf32>
    tpu.vector_store %arg7[%c2_61, %c0_62], %55 {strides = array<i32>} : memref<40x32xf32, #tpu.memory_space<vmem>>, vector<16x1xf32>,
    %c1_63 = arith.constant 1 : index
    %c1_64 = arith.constant 1 : index
    %c0_65 = arith.constant 0 : index
    %c0_66 = arith.constant 0 : index
    %57 = vector.load %arg1[%c1_63, %c1_64, %c0_65, %c0_66] : memref<3x2x16x1xf32, #tpu.memory_space<vmem>>, vector<1x1x16x1xf32>
    %58 = vector.shape_cast %57 : vector<1x1x16x1xf32> to vector<16x1xf32>
    %c22_67 = arith.constant 22 : index
    %c0_68 = arith.constant 0 : index
    %59 = vector.load %arg7[%c22_67, %c0_68] : memref<40x32xf32, #tpu.memory_space<vmem>>, vector<16x1xf32>
    tpu.vector_store %arg7[%c22_67, %c0_68], %58 {strides = array<i32>} : memref<40x32xf32, #tpu.memory_space<vmem>>, vector<16x1xf32>,
    %c0_69 = arith.constant 0 : index
    %c0_70 = arith.constant 0 : index
    %60 = vector.load %arg7[%c0_69, %c0_70] : memref<40x32xf32, #tpu.memory_space<vmem>>, vector<36x32xf32>
    %c1_71 = arith.constant 1 : index
    %c0_72 = arith.constant 0 : index
    %61 = vector.load %arg7[%c1_71, %c0_72] : memref<40x32xf32, #tpu.memory_space<vmem>>, vector<36x32xf32>
    %c2_73 = arith.constant 2 : index
    %c0_74 = arith.constant 0 : index
    %62 = vector.load %arg7[%c2_73, %c0_74] : memref<40x32xf32, #tpu.memory_space<vmem>>, vector<36x32xf32>
    %c3_75 = arith.constant 3 : index
    %c0_76 = arith.constant 0 : index
    %63 = vector.load %arg7[%c3_75, %c0_76] : memref<40x32xf32, #tpu.memory_space<vmem>>, vector<36x32xf32>
    %c4_77 = arith.constant 4 : index
    %c0_78 = arith.constant 0 : index
    %64 = vector.load %arg7[%c4_77, %c0_78] : memref<40x32xf32, #tpu.memory_space<vmem>>, vector<36x32xf32>
    %65 = tpu.concatenate %60, %61, %62, %63, %64 in 1 : vector<36x32xf32>, vector<36x32xf32>, vector<36x32xf32>, vector<36x32xf32>, vector<36x32xf32> -> vector<36x160xf32>
    %c1_79 = arith.constant 1 : index
    %c0_80 = arith.constant 0 : index
    %c0_81 = arith.constant 0 : index
    %c0_82 = arith.constant 0 : index
    %66 = vector.load %arg2[%c1_79, %c0_80, %c0_81, %c0_82] : memref<3x2x160x32xf32, #tpu.memory_space<vmem>>, vector<1x1x160x32xf32>
    %67 = vector.shape_cast %66 : vector<1x1x160x32xf32> to vector<160x32xf32>
    %cst_83 = arith.constant dense<0.000000e+00> : vector<36x32xf32>
    %68 = tpu.matmul %65, %67, %cst_83 {dimension_numbers = #tpu.dot_dimension_numbers<[1], [0], [0], [1], [0, 0, 1, 1], [], []>} : vector<36x160xf32>, vector<160x32xf32>, vector<36x32xf32> -> vector<36x32xf32>
    %c1_84 = arith.constant 1 : index
    %c0_85 = arith.constant 0 : index
    %c0_86 = arith.constant 0 : index
    %c0_87 = arith.constant 0 : index
    %69 = vector.load %arg3[%c1_84, %c0_85, %c0_86, %c0_87] : memref<3x2x1x32xf32, #tpu.memory_space<vmem>>, vector<1x1x1x32xf32>
    %70 = vector.shape_cast %69 : vector<1x1x1x32xf32> to vector<1x32xf32>
    %71 = vector.broadcast %70 : vector<1x32xf32> to vector<36x32xf32>
    %72 = arith.addf %68, %71 : vector<36x32xf32>
    %cst_88 = arith.constant 0.000000e+00 : f32
    %73 = vector.broadcast %cst_88 : f32 to vector<36x32xf32>
    %74 = arith.cmpf ogt, %72, %73 : vector<36x32xf32>
    %75 = math.exp %72 : vector<36x32xf32>
    %cst_89 = arith.constant 1.000000e+00 : f32
    %76 = vector.broadcast %cst_89 : f32 to vector<36x32xf32>
    %77 = arith.subf %75, %76 : vector<36x32xf32>
    %78 = arith.select %74, %72, %77 : vector<36x32xi1>, vector<36x32xf32>
    %79 = vector.extract_strided_slice %78 {offsets = [0, 0], sizes = [16, 32], strides = [1, 1]} : vector<36x32xf32> to vector<16x32xf32>
    %c2_90 = arith.constant 2 : index
    %c0_91 = arith.constant 0 : index
    %80 = vector.load %arg7[%c2_90, %c0_91] : memref<40x32xf32, #tpu.memory_space<vmem>>, vector<16x32xf32>
    tpu.vector_store %arg7[%c2_90, %c0_91], %79 {strides = array<i32>} : memref<40x32xf32, #tpu.memory_space<vmem>>, vector<16x32xf32>,
    %81 = vector.extract_strided_slice %78 {offsets = [20, 0], sizes = [16, 32], strides = [1, 1]} : vector<36x32xf32> to vector<16x32xf32>
    %c22_92 = arith.constant 22 : index
    %c0_93 = arith.constant 0 : index
    %82 = vector.load %arg7[%c22_92, %c0_93] : memref<40x32xf32, #tpu.memory_space<vmem>>, vector<16x32xf32>
    tpu.vector_store %arg7[%c22_92, %c0_93], %81 {strides = array<i32>} : memref<40x32xf32, #tpu.memory_space<vmem>>, vector<16x32xf32>,
    %c0_94 = arith.constant 0 : index
    %c0_95 = arith.constant 0 : index
    %83 = vector.load %arg7[%c0_94, %c0_95] : memref<40x32xf32, #tpu.memory_space<vmem>>, vector<36x32xf32>
    %c1_96 = arith.constant 1 : index
    %c0_97 = arith.constant 0 : index
    %84 = vector.load %arg7[%c1_96, %c0_97] : memref<40x32xf32, #tpu.memory_space<vmem>>, vector<36x32xf32>
    %c2_98 = arith.constant 2 : index
    %c0_99 = arith.constant 0 : index
    %85 = vector.load %arg7[%c2_98, %c0_99] : memref<40x32xf32, #tpu.memory_space<vmem>>, vector<36x32xf32>
    %c3_100 = arith.constant 3 : index
    %c0_101 = arith.constant 0 : index
    %86 = vector.load %arg7[%c3_100, %c0_101] : memref<40x32xf32, #tpu.memory_space<vmem>>, vector<36x32xf32>
    %c4_102 = arith.constant 4 : index
    %c0_103 = arith.constant 0 : index
    %87 = vector.load %arg7[%c4_102, %c0_103] : memref<40x32xf32, #tpu.memory_space<vmem>>, vector<36x32xf32>
    %88 = tpu.concatenate %83, %84, %85, %86, %87 in 1 : vector<36x32xf32>, vector<36x32xf32>, vector<36x32xf32>, vector<36x32xf32>, vector<36x32xf32> -> vector<36x160xf32>
    %c1_104 = arith.constant 1 : index
    %c1_105 = arith.constant 1 : index
    %c0_106 = arith.constant 0 : index
    %c0_107 = arith.constant 0 : index
    %89 = vector.load %arg2[%c1_104, %c1_105, %c0_106, %c0_107] : memref<3x2x160x32xf32, #tpu.memory_space<vmem>>, vector<1x1x160x32xf32>
    %90 = vector.shape_cast %89 : vector<1x1x160x32xf32> to vector<160x32xf32>
    %cst_108 = arith.constant dense<0.000000e+00> : vector<36x32xf32>
    %91 = tpu.matmul %88, %90, %cst_108 {dimension_numbers = #tpu.dot_dimension_numbers<[1], [0], [0], [1], [0, 0, 1, 1], [], []>} : vector<36x160xf32>, vector<160x32xf32>, vector<36x32xf32> -> vector<36x32xf32>
    %c1_109 = arith.constant 1 : index
    %c1_110 = arith.constant 1 : index
    %c0_111 = arith.constant 0 : index
    %c0_112 = arith.constant 0 : index
    %92 = vector.load %arg3[%c1_109, %c1_110, %c0_111, %c0_112] : memref<3x2x1x32xf32, #tpu.memory_space<vmem>>, vector<1x1x1x32xf32>
    %93 = vector.shape_cast %92 : vector<1x1x1x32xf32> to vector<1x32xf32>
    %94 = vector.broadcast %93 : vector<1x32xf32> to vector<36x32xf32>
    %95 = arith.addf %91, %94 : vector<36x32xf32>
    %cst_113 = arith.constant 0.000000e+00 : f32
    %96 = vector.broadcast %cst_113 : f32 to vector<36x32xf32>
    %97 = arith.cmpf ogt, %95, %96 : vector<36x32xf32>
    %98 = math.exp %95 : vector<36x32xf32>
    %cst_114 = arith.constant 1.000000e+00 : f32
    %99 = vector.broadcast %cst_114 : f32 to vector<36x32xf32>
    %100 = arith.subf %98, %99 : vector<36x32xf32>
    %101 = arith.select %97, %95, %100 : vector<36x32xi1>, vector<36x32xf32>
    %102 = vector.extract_strided_slice %101 {offsets = [0, 0], sizes = [16, 32], strides = [1, 1]} : vector<36x32xf32> to vector<16x32xf32>
    %c0_115 = arith.constant 0 : index
    %c32 = arith.constant 32 : index
    %103 = vector.load %arg8[%c0_115, %c32] : memref<32x96xf32, #tpu.memory_space<vmem>>, vector<16x32xf32>
    tpu.vector_store %arg8[%c0_115, %c32], %102 {strides = array<i32>} : memref<32x96xf32, #tpu.memory_space<vmem>>, vector<16x32xf32>,
    %104 = vector.extract_strided_slice %101 {offsets = [20, 0], sizes = [16, 32], strides = [1, 1]} : vector<36x32xf32> to vector<16x32xf32>
    %c16_116 = arith.constant 16 : index
    %c32_117 = arith.constant 32 : index
    %105 = vector.load %arg8[%c16_116, %c32_117] : memref<32x96xf32, #tpu.memory_space<vmem>>, vector<16x32xf32>
    tpu.vector_store %arg8[%c16_116, %c32_117], %104 {strides = array<i32>} : memref<32x96xf32, #tpu.memory_space<vmem>>, vector<16x32xf32>,
    %c2_118 = arith.constant 2 : index
    %c0_119 = arith.constant 0 : index
    %c0_120 = arith.constant 0 : index
    %c0_121 = arith.constant 0 : index
    %106 = vector.load %arg1[%c2_118, %c0_119, %c0_120, %c0_121] : memref<3x2x16x1xf32, #tpu.memory_space<vmem>>, vector<1x1x16x1xf32>
    %107 = vector.shape_cast %106 : vector<1x1x16x1xf32> to vector<16x1xf32>
    %c2_122 = arith.constant 2 : index
    %c0_123 = arith.constant 0 : index
    %108 = vector.load %arg7[%c2_122, %c0_123] : memref<40x32xf32, #tpu.memory_space<vmem>>, vector<16x1xf32>
    tpu.vector_store %arg7[%c2_122, %c0_123], %107 {strides = array<i32>} : memref<40x32xf32, #tpu.memory_space<vmem>>, vector<16x1xf32>,
    %c2_124 = arith.constant 2 : index
    %c1_125 = arith.constant 1 : index
    %c0_126 = arith.constant 0 : index
    %c0_127 = arith.constant 0 : index
    %109 = vector.load %arg1[%c2_124, %c1_125, %c0_126, %c0_127] : memref<3x2x16x1xf32, #tpu.memory_space<vmem>>, vector<1x1x16x1xf32>
    %110 = vector.shape_cast %109 : vector<1x1x16x1xf32> to vector<16x1xf32>
    %c22_128 = arith.constant 22 : index
    %c0_129 = arith.constant 0 : index
    %111 = vector.load %arg7[%c22_128, %c0_129] : memref<40x32xf32, #tpu.memory_space<vmem>>, vector<16x1xf32>
    tpu.vector_store %arg7[%c22_128, %c0_129], %110 {strides = array<i32>} : memref<40x32xf32, #tpu.memory_space<vmem>>, vector<16x1xf32>,
    %c0_130 = arith.constant 0 : index
    %c0_131 = arith.constant 0 : index
    %112 = vector.load %arg7[%c0_130, %c0_131] : memref<40x32xf32, #tpu.memory_space<vmem>>, vector<36x32xf32>
    %c1_132 = arith.constant 1 : index
    %c0_133 = arith.constant 0 : index
    %113 = vector.load %arg7[%c1_132, %c0_133] : memref<40x32xf32, #tpu.memory_space<vmem>>, vector<36x32xf32>
    %c2_134 = arith.constant 2 : index
    %c0_135 = arith.constant 0 : index
    %114 = vector.load %arg7[%c2_134, %c0_135] : memref<40x32xf32, #tpu.memory_space<vmem>>, vector<36x32xf32>
    %c3_136 = arith.constant 3 : index
    %c0_137 = arith.constant 0 : index
    %115 = vector.load %arg7[%c3_136, %c0_137] : memref<40x32xf32, #tpu.memory_space<vmem>>, vector<36x32xf32>
    %c4_138 = arith.constant 4 : index
    %c0_139 = arith.constant 0 : index
    %116 = vector.load %arg7[%c4_138, %c0_139] : memref<40x32xf32, #tpu.memory_space<vmem>>, vector<36x32xf32>
    %117 = tpu.concatenate %112, %113, %114, %115, %116 in 1 : vector<36x32xf32>, vector<36x32xf32>, vector<36x32xf32>, vector<36x32xf32>, vector<36x32xf32> -> vector<36x160xf32>
    %c2_140 = arith.constant 2 : index
    %c0_141 = arith.constant 0 : index
    %c0_142 = arith.constant 0 : index
    %c0_143 = arith.constant 0 : index
    %118 = vector.load %arg2[%c2_140, %c0_141, %c0_142, %c0_143] : memref<3x2x160x32xf32, #tpu.memory_space<vmem>>, vector<1x1x160x32xf32>
    %119 = vector.shape_cast %118 : vector<1x1x160x32xf32> to vector<160x32xf32>
    %cst_144 = arith.constant dense<0.000000e+00> : vector<36x32xf32>
    %120 = tpu.matmul %117, %119, %cst_144 {dimension_numbers = #tpu.dot_dimension_numbers<[1], [0], [0], [1], [0, 0, 1, 1], [], []>} : vector<36x160xf32>, vector<160x32xf32>, vector<36x32xf32> -> vector<36x32xf32>
    %c2_145 = arith.constant 2 : index
    %c0_146 = arith.constant 0 : index
    %c0_147 = arith.constant 0 : index
    %c0_148 = arith.constant 0 : index
    %121 = vector.load %arg3[%c2_145, %c0_146, %c0_147, %c0_148] : memref<3x2x1x32xf32, #tpu.memory_space<vmem>>, vector<1x1x1x32xf32>
    %122 = vector.shape_cast %121 : vector<1x1x1x32xf32> to vector<1x32xf32>
    %123 = vector.broadcast %122 : vector<1x32xf32> to vector<36x32xf32>
    %124 = arith.addf %120, %123 : vector<36x32xf32>
    %cst_149 = arith.constant 0.000000e+00 : f32
    %125 = vector.broadcast %cst_149 : f32 to vector<36x32xf32>
    %126 = arith.cmpf ogt, %124, %125 : vector<36x32xf32>
    %127 = math.exp %124 : vector<36x32xf32>
    %cst_150 = arith.constant 1.000000e+00 : f32
    %128 = vector.broadcast %cst_150 : f32 to vector<36x32xf32>
    %129 = arith.subf %127, %128 : vector<36x32xf32>
    %130 = arith.select %126, %124, %129 : vector<36x32xi1>, vector<36x32xf32>
    %131 = vector.extract_strided_slice %130 {offsets = [0, 0], sizes = [16, 32], strides = [1, 1]} : vector<36x32xf32> to vector<16x32xf32>
    %c2_151 = arith.constant 2 : index
    %c0_152 = arith.constant 0 : index
    %132 = vector.load %arg7[%c2_151, %c0_152] : memref<40x32xf32, #tpu.memory_space<vmem>>, vector<16x32xf32>
    tpu.vector_store %arg7[%c2_151, %c0_152], %131 {strides = array<i32>} : memref<40x32xf32, #tpu.memory_space<vmem>>, vector<16x32xf32>,
    %133 = vector.extract_strided_slice %130 {offsets = [20, 0], sizes = [16, 32], strides = [1, 1]} : vector<36x32xf32> to vector<16x32xf32>
    %c22_153 = arith.constant 22 : index
    %c0_154 = arith.constant 0 : index
    %134 = vector.load %arg7[%c22_153, %c0_154] : memref<40x32xf32, #tpu.memory_space<vmem>>, vector<16x32xf32>
    tpu.vector_store %arg7[%c22_153, %c0_154], %133 {strides = array<i32>} : memref<40x32xf32, #tpu.memory_space<vmem>>, vector<16x32xf32>,
    %c0_155 = arith.constant 0 : index
    %c0_156 = arith.constant 0 : index
    %135 = vector.load %arg7[%c0_155, %c0_156] : memref<40x32xf32, #tpu.memory_space<vmem>>, vector<36x32xf32>
    %c1_157 = arith.constant 1 : index
    %c0_158 = arith.constant 0 : index
    %136 = vector.load %arg7[%c1_157, %c0_158] : memref<40x32xf32, #tpu.memory_space<vmem>>, vector<36x32xf32>
    %c2_159 = arith.constant 2 : index
    %c0_160 = arith.constant 0 : index
    %137 = vector.load %arg7[%c2_159, %c0_160] : memref<40x32xf32, #tpu.memory_space<vmem>>, vector<36x32xf32>
    %c3_161 = arith.constant 3 : index
    %c0_162 = arith.constant 0 : index
    %138 = vector.load %arg7[%c3_161, %c0_162] : memref<40x32xf32, #tpu.memory_space<vmem>>, vector<36x32xf32>
    %c4_163 = arith.constant 4 : index
    %c0_164 = arith.constant 0 : index
    %139 = vector.load %arg7[%c4_163, %c0_164] : memref<40x32xf32, #tpu.memory_space<vmem>>, vector<36x32xf32>
    %140 = tpu.concatenate %135, %136, %137, %138, %139 in 1 : vector<36x32xf32>, vector<36x32xf32>, vector<36x32xf32>, vector<36x32xf32>, vector<36x32xf32> -> vector<36x160xf32>
    %c2_165 = arith.constant 2 : index
    %c1_166 = arith.constant 1 : index
    %c0_167 = arith.constant 0 : index
    %c0_168 = arith.constant 0 : index
    %141 = vector.load %arg2[%c2_165, %c1_166, %c0_167, %c0_168] : memref<3x2x160x32xf32, #tpu.memory_space<vmem>>, vector<1x1x160x32xf32>
    %142 = vector.shape_cast %141 : vector<1x1x160x32xf32> to vector<160x32xf32>
    %cst_169 = arith.constant dense<0.000000e+00> : vector<36x32xf32>
    %143 = tpu.matmul %140, %142, %cst_169 {dimension_numbers = #tpu.dot_dimension_numbers<[1], [0], [0], [1], [0, 0, 1, 1], [], []>} : vector<36x160xf32>, vector<160x32xf32>, vector<36x32xf32> -> vector<36x32xf32>
    %c2_170 = arith.constant 2 : index
    %c1_171 = arith.constant 1 : index
    %c0_172 = arith.constant 0 : index
    %c0_173 = arith.constant 0 : index
    %144 = vector.load %arg3[%c2_170, %c1_171, %c0_172, %c0_173] : memref<3x2x1x32xf32, #tpu.memory_space<vmem>>, vector<1x1x1x32xf32>
    %145 = vector.shape_cast %144 : vector<1x1x1x32xf32> to vector<1x32xf32>
    %146 = vector.broadcast %145 : vector<1x32xf32> to vector<36x32xf32>
    %147 = arith.addf %143, %146 : vector<36x32xf32>
    %cst_174 = arith.constant 0.000000e+00 : f32
    %148 = vector.broadcast %cst_174 : f32 to vector<36x32xf32>
    %149 = arith.cmpf ogt, %147, %148 : vector<36x32xf32>
    %150 = math.exp %147 : vector<36x32xf32>
    %cst_175 = arith.constant 1.000000e+00 : f32
    %151 = vector.broadcast %cst_175 : f32 to vector<36x32xf32>
    %152 = arith.subf %150, %151 : vector<36x32xf32>
    %153 = arith.select %149, %147, %152 : vector<36x32xi1>, vector<36x32xf32>
    %154 = vector.extract_strided_slice %153 {offsets = [0, 0], sizes = [16, 32], strides = [1, 1]} : vector<36x32xf32> to vector<16x32xf32>
    %c0_176 = arith.constant 0 : index
    %c64 = arith.constant 64 : index
    %155 = vector.load %arg8[%c0_176, %c64] : memref<32x96xf32, #tpu.memory_space<vmem>>, vector<16x32xf32>
    tpu.vector_store %arg8[%c0_176, %c64], %154 {strides = array<i32>} : memref<32x96xf32, #tpu.memory_space<vmem>>, vector<16x32xf32>,
    %156 = vector.extract_strided_slice %153 {offsets = [20, 0], sizes = [16, 32], strides = [1, 1]} : vector<36x32xf32> to vector<16x32xf32>
    %c16_177 = arith.constant 16 : index
    %c64_178 = arith.constant 64 : index
    %157 = vector.load %arg8[%c16_177, %c64_178] : memref<32x96xf32, #tpu.memory_space<vmem>>, vector<16x32xf32>
    tpu.vector_store %arg8[%c16_177, %c64_178], %156 {strides = array<i32>} : memref<32x96xf32, #tpu.memory_space<vmem>>, vector<16x32xf32>,
    %c0_179 = arith.constant 0 : index
    %c0_180 = arith.constant 0 : index
    %158 = vector.load %arg8[%c0_179, %c0_180] : memref<32x96xf32, #tpu.memory_space<vmem>>, vector<32x96xf32>
    %c0_181 = arith.constant 0 : index
    %c0_182 = arith.constant 0 : index
    %159 = vector.load %arg4[%c0_181, %c0_182] : memref<96x3xf32, #tpu.memory_space<vmem>>, vector<96x3xf32>
    %cst_183 = arith.constant dense<0.000000e+00> : vector<32x3xf32>
    %160 = tpu.matmul %158, %159, %cst_183 {dimension_numbers = #tpu.dot_dimension_numbers<[1], [0], [0], [1], [0, 0, 1, 1], [], []>} : vector<32x96xf32>, vector<96x3xf32>, vector<32x3xf32> -> vector<32x3xf32>
    %c0_184 = arith.constant 0 : index
    %c0_185 = arith.constant 0 : index
    %161 = vector.load %arg5[%c0_184, %c0_185] : memref<1x3xf32, #tpu.memory_space<vmem>>, vector<1x3xf32>
    %162 = vector.broadcast %161 : vector<1x3xf32> to vector<32x3xf32>
    %163 = arith.addf %160, %162 : vector<32x3xf32>
    %cst_186 = arith.constant 0.000000e+00 : f32
    %164 = vector.broadcast %cst_186 : f32 to vector<32x3xf32>
    %165 = arith.cmpf ogt, %163, %164 : vector<32x3xf32>
    %166 = math.exp %163 : vector<32x3xf32>
    %cst_187 = arith.constant 1.000000e+00 : f32
    %167 = vector.broadcast %cst_187 : f32 to vector<32x3xf32>
    %168 = arith.subf %166, %167 : vector<32x3xf32>
    %169 = arith.select %165, %163, %168 : vector<32x3xi1>, vector<32x3xf32>
    %170 = vector.extract_strided_slice %169 {offsets = [0, 0], sizes = [16, 3], strides = [1, 1]} : vector<32x3xf32> to vector<16x3xf32>
    %c2_i32 = arith.constant 2 : i32
    %171 = arith.muli %arg0, %c2_i32 : i32
    %c0_i32 = arith.constant 0 : i32
    %172 = arith.addi %171, %c0_i32 : i32
    %173 = arith.index_cast %172 : i32 to index
    %c0_188 = arith.constant 0 : index
    %c0_189 = arith.constant 0 : index
    %174 = vector.load %arg6[%173, %c0_188, %c0_189] : memref<2x16x3xf32, #tpu.memory_space<vmem>>, vector<1x16x3xf32>
    %175 = vector.shape_cast %174 : vector<1x16x3xf32> to vector<16x3xf32>
    %176 = vector.shape_cast %170 : vector<16x3xf32> to vector<1x16x3xf32>
    tpu.vector_store %arg6[%173, %c0_188, %c0_189], %176 {strides = array<i32>} : memref<2x16x3xf32, #tpu.memory_space<vmem>>, vector<1x16x3xf32>,
    %177 = vector.extract_strided_slice %169 {offsets = [16, 0], sizes = [16, 3], strides = [1, 1]} : vector<32x3xf32> to vector<16x3xf32>
    %c2_i32_190 = arith.constant 2 : i32
    %178 = arith.muli %arg0, %c2_i32_190 : i32
    %c1_i32 = arith.constant 1 : i32
    %179 = arith.addi %178, %c1_i32 : i32
    %180 = arith.index_cast %179 : i32 to index
    %c0_191 = arith.constant 0 : index
    %c0_192 = arith.constant 0 : index
    %181 = vector.load %arg6[%180, %c0_191, %c0_192] : memref<2x16x3xf32, #tpu.memory_space<vmem>>, vector<1x16x3xf32>
    %182 = vector.shape_cast %181 : vector<1x16x3xf32> to vector<16x3xf32>
    %183 = vector.shape_cast %177 : vector<16x3xf32> to vector<1x16x3xf32>
    tpu.vector_store %arg6[%180, %c0_191, %c0_192], %183 {strides = array<i32>} : memref<2x16x3xf32, #tpu.memory_space<vmem>>, vector<1x16x3xf32>,
    %c0_i32_193 = arith.constant 0 : i32
    %184 = arith.cmpi eq, %arg0, %c0_i32_193 : i32
    %185 = arith.extui %184 : i1 to i32
    %c0_i32_194 = arith.constant 0 : i32
    %186 = arith.cmpi ne, %185, %c0_i32_194 : i32
    scf.if %186 {
      %c0_195 = arith.constant 0 : index
      %c0_196 = arith.constant 0 : index
      %c0_197 = arith.constant 0 : index
      %187 = vector.load %arg6[%c0_195, %c0_196, %c0_197] : memref<2x16x3xf32, #tpu.memory_space<vmem>>, vector<2x16x3xf32>
      %188 = vector.shape_cast %187 : vector<2x16x3xf32> to vector<1x2x16x3xf32>
      %cst_198 = arith.constant dense<0.000000e+00> : vector<1xf32>
      %189 = vector.multi_reduction <add>, %188, %cst_198 [1, 2, 3] : vector<1x2x16x3xf32> to vector<1xf32>
      %190 = vector.shape_cast %189 : vector<1xf32> to vector<1x1x1x1xf32>
      %191 = vector.extract %190[0, 0, 0, 0] : f32 from vector<1x1x1x1xf32>
      %cst_199 = arith.constant 9.600000e+01 : f32
      %192 = arith.divf %191, %cst_199 : f32
      %193 = vector.broadcast %192 : f32 to vector<2x16x3xf32>
      %194 = arith.subf %187, %193 : vector<2x16x3xf32>
      %195 = arith.mulf %194, %194 : vector<2x16x3xf32>
      %196 = vector.shape_cast %195 : vector<2x16x3xf32> to vector<1x2x16x3xf32>
      %cst_200 = arith.constant dense<0.000000e+00> : vector<1xf32>
      %197 = vector.multi_reduction <add>, %196, %cst_200 [1, 2, 3] : vector<1x2x16x3xf32> to vector<1xf32>
      %198 = vector.shape_cast %197 : vector<1xf32> to vector<1x1x1x1xf32>
      %199 = vector.extract %198[0, 0, 0, 0] : f32 from vector<1x1x1x1xf32>
      %cst_201 = arith.constant 9.500000e+01 : f32
      %200 = arith.divf %199, %cst_201 : f32
      %201 = math.rsqrt %200 : f32
      %202 = vector.broadcast %201 : f32 to vector<2x16x3xf32>
      %203 = arith.mulf %194, %202 : vector<2x16x3xf32>
      %c0_202 = arith.constant 0 : index
      %c0_203 = arith.constant 0 : index
      %c0_204 = arith.constant 0 : index
      %204 = vector.load %arg6[%c0_202, %c0_203, %c0_204] : memref<2x16x3xf32, #tpu.memory_space<vmem>>, vector<2x16x3xf32>
      tpu.vector_store %arg6[%c0_202, %c0_203, %c0_204], %203 {strides = array<i32>} : memref<2x16x3xf32, #tpu.memory_space<vmem>>, vector<2x16x3xf32>,
    } else {
    }
    return
  }
  func.func @transform_0(%arg0: i32) -> (i32, i32, i32, i32) {
    %c0_i32 = arith.constant 0 : i32
    %c0_i32_0 = arith.constant 0 : i32
    %c0_i32_1 = arith.constant 0 : i32
    %c0_i32_2 = arith.constant 0 : i32
    return %c0_i32, %arg0, %c0_i32_0, %c0_i32_1 : i32, i32, i32, i32
  }
  func.func @transform_1(%arg0: i32) -> (i32, i32, i32, i32) {
    %c0_i32 = arith.constant 0 : i32
    %c0_i32_0 = arith.constant 0 : i32
    %c0_i32_1 = arith.constant 0 : i32
    %c0_i32_2 = arith.constant 0 : i32
    %c0_i32_3 = arith.constant 0 : i32
    return %c0_i32, %c0_i32_0, %c0_i32_1, %c0_i32_2 : i32, i32, i32, i32
  }
  func.func @transform_2(%arg0: i32) -> (i32, i32, i32, i32) {
    %c0_i32 = arith.constant 0 : i32
    %c0_i32_0 = arith.constant 0 : i32
    %c0_i32_1 = arith.constant 0 : i32
    %c0_i32_2 = arith.constant 0 : i32
    %c0_i32_3 = arith.constant 0 : i32
    return %c0_i32, %c0_i32_0, %c0_i32_1, %c0_i32_2 : i32, i32, i32, i32
  }
  func.func @transform_3(%arg0: i32) -> (i32, i32) {
    %c0_i32 = arith.constant 0 : i32
    %c0_i32_0 = arith.constant 0 : i32
    %c0_i32_1 = arith.constant 0 : i32
    return %c0_i32, %c0_i32_0 : i32, i32
  }
  func.func @transform_4(%arg0: i32) -> (i32, i32) {
    %c0_i32 = arith.constant 0 : i32
    %c0_i32_0 = arith.constant 0 : i32
    %c0_i32_1 = arith.constant 0 : i32
    return %c0_i32, %c0_i32_0 : i32, i32
  }
  func.func @transform_5(%arg0: i32) -> (i32, i32, i32) {
    %c0_i32 = arith.constant 0 : i32
    %c0_i32_0 = arith.constant 0 : i32
    %c0_i32_1 = arith.constant 0 : i32
    %c0_i32_2 = arith.constant 0 : i32
    return %c0_i32, %c0_i32_0, %c0_i32_1 : i32, i32, i32
  }
}

</mosaic_0001>

<llo_original>
// kernel: enc_forward.1
$region0: #{enc_forward.1}
  #allocation0 [shape = 'u32[]', space=smem, size = 0x4, offset = 0x4, fixed_abs, tag = 'smem constant byte address 0x4 - core index']
  #allocation1 [shape = 'u32[72,128]{1,0:T(1,128)}', space=vmem, size = 0x9000, scoped, tag = 'internal scratch']
  #allocation2 [shape = 'f32[40,32]{1,0:T(8,128)}', space=vmem, size = 0x5000, scoped, tag = 'scratch operand']
  #allocation3 [shape = 'f32[32,96]{1,0:T(8,128)}', space=vmem, size = 0x4000, scoped, tag = 'scratch operand']
  %s0 = inlined_call_operand.vmem [shape: f32[3,2,16,1], index: 0, kind: input, shape index: {}]
  %s1 = inlined_call_operand.vmem [shape: f32[3,2,160,32], index: 1, kind: input, shape index: {}]
  %s2 = inlined_call_operand.vmem [shape: f32[3,2,1,32], index: 2, kind: input, shape index: {}]
  %s3 = inlined_call_operand.vmem [shape: f32[96,3], index: 3, kind: input, shape index: {}]
  %s4 = inlined_call_operand.vmem [shape: f32[1,3], index: 4, kind: input, shape index: {}]
  %s5 = inlined_call_operand.vmem [shape: f32[2,16,3], index: 5, kind: output, shape index: {}]
  %s6 = sld [smem:[#allocation0]]
  $region34: #{enc_forward.1} parent=0
    _
  %s8 = ssub.s32 1, %s6
  %s9 = scalar_select 0, %s8, %s6
  // Predicated region
  $region2: #{enc_forward.1} parent=0 // pred_check
    _
  $region3: #{enc_forward.1} parent=0 // pred_check_branch
    %11 = sbr.rel (0) target = $region5
  $region4: #{enc_forward.1} parent=0 // pred_region
    _
  $region5: #{enc_forward.1} parent=0 // pred_fallthru
    _
  // Predicated region
  $region6: #{enc_forward.1} parent=0 // pred_check
    _
  $region7: #{enc_forward.1} parent=0 // pred_check_branch
    %13 = sbr.rel (0) target = $region9
  $region8: #{enc_forward.1} parent=0 // pred_region
    _
  $region9: #{enc_forward.1} parent=0 // pred_fallthru
    _
  // Predicated region
  $region10: #{enc_forward.1} parent=0 // pred_check
    _
  $region11: #{enc_forward.1} parent=0 // pred_check_branch
    %15 = sbr.rel (0) target = $region13
  $region12: #{enc_forward.1} parent=0 // pred_region
    _
  $region13: #{enc_forward.1} parent=0 // pred_fallthru
    _
  // Predicated region
  $region14: #{enc_forward.1} parent=0 // pred_check
    _
  $region15: #{enc_forward.1} parent=0 // pred_check_branch
    %17 = sbr.rel (0) target = $region17
  $region16: #{enc_forward.1} parent=0 // pred_region
    _
  $region17: #{enc_forward.1} parent=0 // pred_fallthru
    _
  // Predicated region
  $region18: #{enc_forward.1} parent=0 // pred_check
    _
  $region19: #{enc_forward.1} parent=0 // pred_check_branch
    %19 = sbr.rel (0) target = $region21
  $region20: #{enc_forward.1} parent=0 // pred_region
    _
  $region21: #{enc_forward.1} parent=0 // pred_fallthru
    _
  %vm20 = vcmask 261120
  %21 = vst.msk [vmem:[#allocation2] sm:$0xff] %vm20, 0.0
  %22 = vst.msk [vmem:[#allocation2 + $0x8] sm:$0xff] %vm20, 0.0
  %23 = vst.msk [vmem:[#allocation2 + $0x10] sm:$0xff] %vm20, 0.0
  %24 = vst.msk [vmem:[#allocation2 + $0x18] sm:$0xff] %vm20, 0.0
  %25 = vst.msk [vmem:[#allocation2 + $0x20] sm:$0xff] %vm20, 0.0
  %v26 = vld [vmem:[%s0] sm:$0xff]
  %v27 = vld [vmem:[%s0 + $0x8] sm:$0xff]
  %vm28 = vcmask 7168
  %29 = vst.msk [vmem:[#allocation2 + $0x2] sm:$0xff] %vm28, %v26
  %30 = vst.msk [vmem:[#allocation2 + $0xa] sm:$0xff] %vm28, %v27
  %s31 = scalar_lea.vmem %s0, 16
  %v32 = vld [vmem:[%s31] sm:$0xff]
  %v33 = vld [vmem:[%s31 + $0x8] sm:$0xff]
  %34 = vst.msk [vmem:[#allocation2 + $0x16] sm:$0xff] %vm28, %v32
  %35 = vst.msk [vmem:[#allocation2 + $0x1e] sm:$0xff] %vm28, %v33
  %v36 = vld [vmem:[#allocation2] sm:$0xff]
  %v37 = vld [vmem:[#allocation2 + $0x8] sm:$0xff]
  %v38 = vld [vmem:[#allocation2 + $0x10] sm:$0xff]
  %v39 = vld [vmem:[#allocation2 + $0x18] sm:$0xff]
  %v40 = vld [vmem:[#allocation2 + $0x20] sm:$0xf]
  %v41 = vld [vmem:[#allocation2 + $0x1] sm:$0xff]
  %v42 = vld [vmem:[#allocation2 + $0x9] sm:$0xff]
  %v43 = vld [vmem:[#allocation2 + $0x11] sm:$0xff]
  %v44 = vld [vmem:[#allocation2 + $0x19] sm:$0xff]
  %v45 = vld [vmem:[#allocation2 + $0x21] sm:$0xf]
  %v46 = vld [vmem:[#allocation2 + $0x2] sm:$0xff]
  %v47 = vld [vmem:[#allocation2 + $0xa] sm:$0xff]
  %v48 = vld [vmem:[#allocation2 + $0x12] sm:$0xff]
  %v49 = vld [vmem:[#allocation2 + $0x1a] sm:$0xff]
  %v50 = vld [vmem:[#allocation2 + $0x22] sm:$0xf]
  %v51 = vld [vmem:[#allocation2 + $0x3] sm:$0xff]
  %v52 = vld [vmem:[#allocation2 + $0xb] sm:$0xff]
  %v53 = vld [vmem:[#allocation2 + $0x13] sm:$0xff]
  %v54 = vld [vmem:[#allocation2 + $0x1b] sm:$0xff]
  %v55 = vld [vmem:[#allocation2 + $0x23] sm:$0xf]
  %v56 = vld [vmem:[#allocation2 + $0x4] sm:$0xff]
  %v57 = vld [vmem:[#allocation2 + $0xc] sm:$0xff]
  %v58 = vld [vmem:[#allocation2 + $0x14] sm:$0xff]
  %v59 = vld [vmem:[#allocation2 + $0x1c] sm:$0xff]
  %v60 = vld [vmem:[#allocation2 + $0x24] sm:$0xf]
  %66 = vrot.lane.b32.xlu0 %v41, 32
  %v67 = vpop.permute.xlu0 %66
  %68 = vrot.lane.b32.xlu0 %v42, 32
  %v69 = vpop.permute.xlu0 %68
  %70 = vrot.lane.b32.xlu0 %v43, 32
  %v71 = vpop.permute.xlu0 %70
  %72 = vrot.lane.b32.xlu0 %v44, 32
  %v73 = vpop.permute.xlu0 %72
  %74 = vrot.lane.b32.xlu0 %v45, 32
  %v75 = vpop.permute.xlu0 %74
  %86 = vrot.lane.b32.xlu0 %v46, 64
  %v87 = vpop.permute.xlu0 %86
  %88 = vrot.lane.b32.xlu0 %v47, 64
  %v89 = vpop.permute.xlu0 %88
  %90 = vrot.lane.b32.xlu0 %v48, 64
  %v91 = vpop.permute.xlu0 %90
  %92 = vrot.lane.b32.xlu0 %v49, 64
  %v93 = vpop.permute.xlu0 %92
  %94 = vrot.lane.b32.xlu0 %v50, 64
  %v95 = vpop.permute.xlu0 %94
  %106 = vrot.lane.b32.xlu0 %v51, 96
  %v107 = vpop.permute.xlu0 %106
  %108 = vrot.lane.b32.xlu0 %v52, 96
  %v109 = vpop.permute.xlu0 %108
  %110 = vrot.lane.b32.xlu0 %v53, 96
  %v111 = vpop.permute.xlu0 %110
  %112 = vrot.lane.b32.xlu0 %v54, 96
  %v113 = vpop.permute.xlu0 %112
  %114 = vrot.lane.b32.xlu0 %v55, 96
  %v115 = vpop.permute.xlu0 %114
  %v121 = vsel %vm20, %v36, %v67
  %v122 = vsel %vm20, %v37, %v69
  %v123 = vsel %vm20, %v38, %v71
  %v124 = vsel %vm20, %v39, %v73
  %v125 = vsel %vm20, %v40, %v75
  %vm126 = vcmask 523264
  %v127 = vsel %vm126, %v121, %v87
  %v128 = vsel %vm126, %v122, %v89
  %v129 = vsel %vm126, %v123, %v91
  %v130 = vsel %vm126, %v124, %v93
  %v131 = vsel %vm126, %v125, %v95
  %vm132 = vcmask 785408
  %v133 = vsel %vm132, %v127, %v107
  %v134 = vsel %vm132, %v128, %v109
  %v135 = vsel %vm132, %v129, %v111
  %v136 = vsel %vm132, %v130, %v113
  %v137 = vsel %vm132, %v131, %v115
  %v138 = vld [vmem:[%s1] sm:$0xff]
  %v139 = vld [vmem:[%s1 + $0x8] sm:$0xff]
  %v140 = vld [vmem:[%s1 + $0x10] sm:$0xff]
  %v141 = vld [vmem:[%s1 + $0x18] sm:$0xff]
  %v142 = vld [vmem:[%s1 + $0x20] sm:$0xff]
  %v143 = vld [vmem:[%s1 + $0x28] sm:$0xff]
  %v144 = vld [vmem:[%s1 + $0x30] sm:$0xff]
  %v145 = vld [vmem:[%s1 + $0x38] sm:$0xff]
  %v146 = vld [vmem:[%s1 + $0x40] sm:$0xff]
  %v147 = vld [vmem:[%s1 + $0x48] sm:$0xff]
  %v148 = vld [vmem:[%s1 + $0x50] sm:$0xff]
  %v149 = vld [vmem:[%s1 + $0x58] sm:$0xff]
  %v150 = vld [vmem:[%s1 + $0x60] sm:$0xff]
  %v151 = vld [vmem:[%s1 + $0x68] sm:$0xff]
  %v152 = vld [vmem:[%s1 + $0x70] sm:$0xff]
  %v153 = vld [vmem:[%s1 + $0x78] sm:$0xff]
  %v154 = vld [vmem:[%s1 + $0x80] sm:$0xff]
  %v155 = vld [vmem:[%s1 + $0x88] sm:$0xff]
  %v156 = vld [vmem:[%s1 + $0x90] sm:$0xff]
  %v157 = vld [vmem:[%s1 + $0x98] sm:$0xff]
  %v158 = vld [vmem:[%s2] sm:$0x1]
  %v160 = vperm.slane %v158, 0
  %v163 = vsel %vm20, %v56, 0
  %v166 = vsel %vm20, %v57, 0
  %v169 = vsel %vm20, %v58, 0
  %v172 = vsel %vm20, %v59, 0
  %v175 = vsel %vm20, %v60, 0
  %177 = vmatpush.msra.mxu0 %v153
  %178 = vmatpush.msra.mxu0 %v152
  %179 = vmatpush.msra.mxu0 %v151
  %180 = vmatpush.msra.mxu0 %v150
  %181 = vmatpush.msra.mxu0 %v149
  %182 = vmatpush.msra.mxu0 %v148
  %183 = vmatpush.msra.mxu0 %v147
  %184 = vmatpush.msra.mxu0 %v146
  %185 = vmatpush.msra.mxu0 %v145
  %186 = vmatpush.msra.mxu0 %v144
  %187 = vmatpush.msra.mxu0 %v143
  %188 = vmatpush.msra.mxu0 %v142
  %189 = vmatpush.msra.mxu0 %v141
  %190 = vmatpush.msra.mxu0 %v140
  %191 = vmatpush.msra.mxu0 %v139
  %192 = vmatpush.msra.mxu0 %v138
  %193 = vmatmul.f32.gmra.mxu0 %v133
  %v194 = vpop.f32.mrf.mxu0
  %v195 = vadd.f32 %v160, %v194
  %196 = vmatmul.f32.gmra.mxu0 %v134
  %v197 = vpop.f32.mrf.mxu0
  %v198 = vadd.f32 %v160, %v197
  %199 = vmatmul.f32.gmra.mxu0 %v135
  %v200 = vpop.f32.mrf.mxu0
  %v201 = vadd.f32 %v160, %v200
  %202 = vmatmul.f32.gmra.mxu0 %v136
  %v203 = vpop.f32.mrf.mxu0
  %v204 = vadd.f32 %v160, %v203
  %205 = vmatmul.f32.gmra.mxu0 %v137
  %v206 = vpop.f32.mrf.mxu0
  %v207 = vadd.f32 %v160, %v206
  %208 = vdwg.mxu0
  %209 = vmatpush.msra.mxu0 0.0
  %210 = vmatpush.msra.mxu0 0.0
  %211 = vmatpush.msra.mxu0 0.0
  %212 = vmatpush.msra.mxu0 0.0
  %213 = vmatpush.msra.mxu0 0.0
  %214 = vmatpush.msra.mxu0 0.0
  %215 = vmatpush.msra.mxu0 0.0
  %216 = vmatpush.msra.mxu0 0.0
  %217 = vmatpush.msra.mxu0 0.0
  %218 = vmatpush.msra.mxu0 0.0
  %219 = vmatpush.msra.mxu0 0.0
  %220 = vmatpush.msra.mxu0 0.0
  %221 = vmatpush.msra.mxu0 %v157
  %222 = vmatpush.msra.mxu0 %v156
  %223 = vmatpush.msra.mxu0 %v155
  %224 = vmatpush.msra.mxu0 %v154
  %225 = vmatmul.f32.gmra.mxu0 %v163
  %v226 = vpop.f32.mrf.mxu0
  %v227 = vadd.f32 %v195, %v226
  %228 = vmatmul.f32.gmra.mxu0 %v166
  %v229 = vpop.f32.mrf.mxu0
  %v230 = vadd.f32 %v198, %v229
  %231 = vmatmul.f32.gmra.mxu0 %v169
  %v232 = vpop.f32.mrf.mxu0
  %v233 = vadd.f32 %v201, %v232
  %234 = vmatmul.f32.gmra.mxu0 %v172
  %v235 = vpop.f32.mrf.mxu0
  %v236 = vadd.f32 %v204, %v235
  %237 = vmatmul.f32.gmra.mxu0 %v175
  %v238 = vpop.f32.mrf.mxu0
  %v239 = vadd.f32 %v207, %v238
  %240 = vdwg.mxu0
  %vm241 = vcmp.gt.f32.partialorder %v227, 0.0
  %vm242 = vcmp.gt.f32.partialorder %v230, 0.0
  %vm243 = vcmp.gt.f32.partialorder %v233, 0.0
  %vm244 = vcmp.gt.f32.partialorder %v236, 0.0
  %vm245 = vcmp.gt.f32.partialorder %v239, 0.0
  %v246 = vmul.f32 %v227, 1.442695
  %v247 = vpow.pop %v246
  %v248 = vmul.f32 %v230, 1.442695
  %v249 = vpow.pop %v248
  %v250 = vmul.f32 %v233, 1.442695
  %v251 = vpow.pop %v250
  %v252 = vmul.f32 %v236, 1.442695
  %v253 = vpow.pop %v252
  %v254 = vmul.f32 %v239, 1.442695
  %v255 = vpow.pop %v254
  %v256 = vsub.f32 %v247, 1.0
  %v257 = vsub.f32 %v249, 1.0
  %v258 = vsub.f32 %v251, 1.0
  %v259 = vsub.f32 %v253, 1.0
  %v260 = vsub.f32 %v255, 1.0
  %v261 = vsel %vm241, %v227, %v256
  %v262 = vsel %vm242, %v230, %v257
  %v263 = vsel %vm243, %v233, %v258
  %v264 = vsel %vm244, %v236, %v259
  %v265 = vsel %vm245, %v239, %v260
  %266 = vst.msk [vmem:[#allocation2 + $0x2] sm:$0xff] %vm20, %v261
  %267 = vst.msk [vmem:[#allocation2 + $0xa] sm:$0xff] %vm20, %v262
  %vm268 = vcmask 261124
  %269 = vst.msk [vmem:[#allocation2 + $0x12] sm:$0xf0] %vm268, %v263
  %270 = vst.msk [vmem:[#allocation2 + $0x1a] sm:$0xff] %vm20, %v264
  %vm271 = vcmask 257024
  %272 = vst.msk [vmem:[#allocation2 + $0x22] sm:$0xf] %vm271, %v265
  %v273 = vld [vmem:[#allocation2] sm:$0xff]
  %v274 = vld [vmem:[#allocation2 + $0x8] sm:$0xff]
  %v275 = vld [vmem:[#allocation2 + $0x10] sm:$0xff]
  %v276 = vld [vmem:[#allocation2 + $0x18] sm:$0xff]
  %v277 = vld [vmem:[#allocation2 + $0x20] sm:$0xf]
  %v278 = vld [vmem:[#allocation2 + $0x1] sm:$0xff]
  %v279 = vld [vmem:[#allocation2 + $0x9] sm:$0xff]
  %v280 = vld [vmem:[#allocation2 + $0x11] sm:$0xff]
  %v281 = vld [vmem:[#allocation2 + $0x19] sm:$0xff]
  %v282 = vld [vmem:[#allocation2 + $0x21] sm:$0xf]
  %v283 = vld [vmem:[#allocation2 + $0x2] sm:$0xff]
  %v284 = vld [vmem:[#allocation2 + $0xa] sm:$0xff]
  %v285 = vld [vmem:[#allocation2 + $0x12] sm:$0xff]
  %v286 = vld [vmem:[#allocation2 + $0x1a] sm:$0xff]
  %v287 = vld [vmem:[#allocation2 + $0x22] sm:$0xf]
  %v288 = vld [vmem:[#allocation2 + $0x3] sm:$0xff]
  %v289 = vld [vmem:[#allocation2 + $0xb] sm:$0xff]
  %v290 = vld [vmem:[#allocation2 + $0x13] sm:$0xff]
  %v291 = vld [vmem:[#allocation2 + $0x1b] sm:$0xff]
  %v292 = vld [vmem:[#allocation2 + $0x23] sm:$0xf]
  %v293 = vld [vmem:[#allocation2 + $0x4] sm:$0xff]
  %v294 = vld [vmem:[#allocation2 + $0xc] sm:$0xff]
  %v295 = vld [vmem:[#allocation2 + $0x14] sm:$0xff]
  %v296 = vld [vmem:[#allocation2 + $0x1c] sm:$0xff]
  %v297 = vld [vmem:[#allocation2 + $0x24] sm:$0xf]
  %303 = vrot.lane.b32.xlu0 %v278, 32
  %v304 = vpop.permute.xlu0 %303
  %305 = vrot.lane.b32.xlu0 %v279, 32
  %v306 = vpop.permute.xlu0 %305
  %307 = vrot.lane.b32.xlu0 %v280, 32
  %v308 = vpop.permute.xlu0 %307
  %309 = vrot.lane.b32.xlu0 %v281, 32
  %v310 = vpop.permute.xlu0 %309
  %311 = vrot.lane.b32.xlu0 %v282, 32
  %v312 = vpop.permute.xlu0 %311
  %323 = vrot.lane.b32.xlu0 %v283, 64
  %v324 = vpop.permute.xlu0 %323
  %325 = vrot.lane.b32.xlu0 %v284, 64
  %v326 = vpop.permute.xlu0 %325
  %327 = vrot.lane.b32.xlu0 %v285, 64
  %v328 = vpop.permute.xlu0 %327
  %329 = vrot.lane.b32.xlu0 %v286, 64
  %v330 = vpop.permute.xlu0 %329
  %331 = vrot.lane.b32.xlu0 %v287, 64
  %v332 = vpop.permute.xlu0 %331
  %343 = vrot.lane.b32.xlu0 %v288, 96
  %v344 = vpop.permute.xlu0 %343
  %345 = vrot.lane.b32.xlu0 %v289, 96
  %v346 = vpop.permute.xlu0 %345
  %347 = vrot.lane.b32.xlu0 %v290, 96
  %v348 = vpop.permute.xlu0 %347
  %349 = vrot.lane.b32.xlu0 %v291, 96
  %v350 = vpop.permute.xlu0 %349
  %351 = vrot.lane.b32.xlu0 %v292, 96
  %v352 = vpop.permute.xlu0 %351
  %v358 = vsel %vm20, %v273, %v304
  %v359 = vsel %vm20, %v274, %v306
  %v360 = vsel %vm20, %v275, %v308
  %v361 = vsel %vm20, %v276, %v310
  %v362 = vsel %vm20, %v277, %v312
  %v363 = vsel %vm126, %v358, %v324
  %v364 = vsel %vm126, %v359, %v326
  %v365 = vsel %vm126, %v360, %v328
  %v366 = vsel %vm126, %v361, %v330
  %v367 = vsel %vm126, %v362, %v332
  %v368 = vsel %vm132, %v363, %v344
  %v369 = vsel %vm132, %v364, %v346
  %v370 = vsel %vm132, %v365, %v348
  %v371 = vsel %vm132, %v366, %v350
  %v372 = vsel %vm132, %v367, %v352
  %s373 = scalar_lea.vmem %s1, 160
  %v374 = vld [vmem:[%s373] sm:$0xff]
  %v375 = vld [vmem:[%s373 + $0x8] sm:$0xff]
  %v376 = vld [vmem:[%s373 + $0x10] sm:$0xff]
  %v377 = vld [vmem:[%s373 + $0x18] sm:$0xff]
  %v378 = vld [vmem:[%s373 + $0x20] sm:$0xff]
  %v379 = vld [vmem:[%s373 + $0x28] sm:$0xff]
  %v380 = vld [vmem:[%s373 + $0x30] sm:$0xff]
  %v381 = vld [vmem:[%s373 + $0x38] sm:$0xff]
  %v382 = vld [vmem:[%s373 + $0x40] sm:$0xff]
  %v383 = vld [vmem:[%s373 + $0x48] sm:$0xff]
  %v384 = vld [vmem:[%s373 + $0x50] sm:$0xff]
  %v385 = vld [vmem:[%s373 + $0x58] sm:$0xff]
  %v386 = vld [vmem:[%s373 + $0x60] sm:$0xff]
  %v387 = vld [vmem:[%s373 + $0x68] sm:$0xff]
  %v388 = vld [vmem:[%s373 + $0x70] sm:$0xff]
  %v389 = vld [vmem:[%s373 + $0x78] sm:$0xff]
  %v390 = vld [vmem:[%s373 + $0x80] sm:$0xff]
  %v391 = vld [vmem:[%s373 + $0x88] sm:$0xff]
  %v392 = vld [vmem:[%s373 + $0x90] sm:$0xff]
  %v393 = vld [vmem:[%s373 + $0x98] sm:$0xff]
  %s394 = scalar_lea.vmem %s2, 1
  %v395 = vld [vmem:[%s394] sm:$0x1]
  %v397 = vperm.slane %v395, 0
  %v400 = vsel %vm20, %v293, 0
  %v403 = vsel %vm20, %v294, 0
  %v406 = vsel %vm20, %v295, 0
  %v409 = vsel %vm20, %v296, 0
  %v412 = vsel %vm20, %v297, 0
  %414 = vmatpush.msra.mxu0 %v389
  %415 = vmatpush.msra.mxu0 %v388
  %416 = vmatpush.msra.mxu0 %v387
  %417 = vmatpush.msra.mxu0 %v386
  %418 = vmatpush.msra.mxu0 %v385
  %419 = vmatpush.msra.mxu0 %v384
  %420 = vmatpush.msra.mxu0 %v383
  %421 = vmatpush.msra.mxu0 %v382
  %422 = vmatpush.msra.mxu0 %v381
  %423 = vmatpush.msra.mxu0 %v380
  %424 = vmatpush.msra.mxu0 %v379
  %425 = vmatpush.msra.mxu0 %v378
  %426 = vmatpush.msra.mxu0 %v377
  %427 = vmatpush.msra.mxu0 %v376
  %428 = vmatpush.msra.mxu0 %v375
  %429 = vmatpush.msra.mxu0 %v374
  %430 = vmatmul.f32.gmra.mxu0 %v368
  %v431 = vpop.f32.mrf.mxu0
  %v432 = vadd.f32 %v397, %v431
  %433 = vmatmul.f32.gmra.mxu0 %v369
  %v434 = vpop.f32.mrf.mxu0
  %v435 = vadd.f32 %v397, %v434
  %436 = vmatmul.f32.gmra.mxu0 %v370
  %v437 = vpop.f32.mrf.mxu0
  %v438 = vadd.f32 %v397, %v437
  %439 = vmatmul.f32.gmra.mxu0 %v371
  %v440 = vpop.f32.mrf.mxu0
  %v441 = vadd.f32 %v397, %v440
  %442 = vmatmul.f32.gmra.mxu0 %v372
  %v443 = vpop.f32.mrf.mxu0
  %v444 = vadd.f32 %v397, %v443
  %445 = vdwg.mxu0
  %446 = vmatpush.msra.mxu0 0.0
  %447 = vmatpush.msra.mxu0 0.0
  %448 = vmatpush.msra.mxu0 0.0
  %449 = vmatpush.msra.mxu0 0.0
  %450 = vmatpush.msra.mxu0 0.0
  %451 = vmatpush.msra.mxu0 0.0
  %452 = vmatpush.msra.mxu0 0.0
  %453 = vmatpush.msra.mxu0 0.0
  %454 = vmatpush.msra.mxu0 0.0
  %455 = vmatpush.msra.mxu0 0.0
  %456 = vmatpush.msra.mxu0 0.0
  %457 = vmatpush.msra.mxu0 0.0
  %458 = vmatpush.msra.mxu0 %v393
  %459 = vmatpush.msra.mxu0 %v392
  %460 = vmatpush.msra.mxu0 %v391
  %461 = vmatpush.msra.mxu0 %v390
  %462 = vmatmul.f32.gmra.mxu0 %v400
  %v463 = vpop.f32.mrf.mxu0
  %v464 = vadd.f32 %v432, %v463
  %465 = vmatmul.f32.gmra.mxu0 %v403
  %v466 = vpop.f32.mrf.mxu0
  %v467 = vadd.f32 %v435, %v466
  %468 = vmatmul.f32.gmra.mxu0 %v406
  %v469 = vpop.f32.mrf.mxu0
  %v470 = vadd.f32 %v438, %v469
  %471 = vmatmul.f32.gmra.mxu0 %v409
  %v472 = vpop.f32.mrf.mxu0
  %v473 = vadd.f32 %v441, %v472
  %474 = vmatmul.f32.gmra.mxu0 %v412
  %v475 = vpop.f32.mrf.mxu0
  %v476 = vadd.f32 %v444, %v475
  %477 = vdwg.mxu0
  %vm478 = vcmp.gt.f32.partialorder %v464, 0.0
  %vm479 = vcmp.gt.f32.partialorder %v467, 0.0
  %vm480 = vcmp.gt.f32.partialorder %v470, 0.0
  %vm481 = vcmp.gt.f32.partialorder %v473, 0.0
  %vm482 = vcmp.gt.f32.partialorder %v476, 0.0
  %v483 = vmul.f32 %v464, 1.442695
  %v484 = vpow.pop %v483
  %v485 = vmul.f32 %v467, 1.442695
  %v486 = vpow.pop %v485
  %v487 = vmul.f32 %v470, 1.442695
  %v488 = vpow.pop %v487
  %v489 = vmul.f32 %v473, 1.442695
  %v490 = vpow.pop %v489
  %v491 = vmul.f32 %v476, 1.442695
  %v492 = vpow.pop %v491
  %v493 = vsub.f32 %v484, 1.0
  %v494 = vsub.f32 %v486, 1.0
  %v495 = vsub.f32 %v488, 1.0
  %v496 = vsub.f32 %v490, 1.0
  %v497 = vsub.f32 %v492, 1.0
  %v498 = vsel %vm478, %v464, %v493
  %v499 = vsel %vm479, %v467, %v494
  %v500 = vsel %vm480, %v470, %v495
  %v501 = vsel %vm481, %v473, %v496
  %v502 = vsel %vm482, %v476, %v497
  %503 = vst.msk [vmem:[#allocation3] sm:$0xff] %vm20, %v498
  %504 = vst.msk [vmem:[#allocation3 + $0x8] sm:$0xff] %vm20, %v499
  %505 = vst.msk [vmem:[#allocation3 + $0xc] sm:$0xf0] %vm268, %v500
  %506 = vst.msk [vmem:[#allocation3 + $0x14] sm:$0xff] %vm20, %v501
  %507 = vst.msk [vmem:[#allocation3 + $0x1c] sm:$0xf] %vm271, %v502
  %s508 = scalar_lea.vmem %s0, 32
  %v509 = vld [vmem:[%s508] sm:$0xff]
  %v510 = vld [vmem:[%s508 + $0x8] sm:$0xff]
  %511 = vst.msk [vmem:[#allocation2 + $0x2] sm:$0xff] %vm28, %v509
  %512 = vst.msk [vmem:[#allocation2 + $0xa] sm:$0xff] %vm28, %v510
  %s513 = scalar_lea.vmem %s0, 48
  %v514 = vld [vmem:[%s513] sm:$0xff]
  %v515 = vld [vmem:[%s513 + $0x8] sm:$0xff]
  %516 = vst.msk [vmem:[#allocation2 + $0x16] sm:$0xff] %vm28, %v514
  %517 = vst.msk [vmem:[#allocation2 + $0x1e] sm:$0xff] %vm28, %v515
  %v518 = vld [vmem:[#allocation2] sm:$0xff]
  %v519 = vld [vmem:[#allocation2 + $0x8] sm:$0xff]
  %v520 = vld [vmem:[#allocation2 + $0x10] sm:$0xff]
  %v521 = vld [vmem:[#allocation2 + $0x18] sm:$0xff]
  %v522 = vld [vmem:[#allocation2 + $0x20] sm:$0xf]
  %v523 = vld [vmem:[#allocation2 + $0x1] sm:$0xff]
  %v524 = vld [vmem:[#allocation2 + $0x9] sm:$0xff]
  %v525 = vld [vmem:[#allocation2 + $0x11] sm:$0xff]
  %v526 = vld [vmem:[#allocation2 + $0x19] sm:$0xff]
  %v527 = vld [vmem:[#allocation2 + $0x21] sm:$0xf]
  %v528 = vld [vmem:[#allocation2 + $0x2] sm:$0xff]
  %v529 = vld [vmem:[#allocation2 + $0xa] sm:$0xff]
  %v530 = vld [vmem:[#allocation2 + $0x12] sm:$0xff]
  %v531 = vld [vmem:[#allocation2 + $0x1a] sm:$0xff]
  %v532 = vld [vmem:[#allocation2 + $0x22] sm:$0xf]
  %v533 = vld [vmem:[#allocation2 + $0x3] sm:$0xff]
  %v534 = vld [vmem:[#allocation2 + $0xb] sm:$0xff]
  %v535 = vld [vmem:[#allocation2 + $0x13] sm:$0xff]
  %v536 = vld [vmem:[#allocation2 + $0x1b] sm:$0xff]
  %v537 = vld [vmem:[#allocation2 + $0x23] sm:$0xf]
  %v538 = vld [vmem:[#allocation2 + $0x4] sm:$0xff]
  %v539 = vld [vmem:[#allocation2 + $0xc] sm:$0xff]
  %v540 = vld [vmem:[#allocation2 + $0x14] sm:$0xff]
  %v541 = vld [vmem:[#allocation2 + $0x1c] sm:$0xff]
  %v542 = vld [vmem:[#allocation2 + $0x24] sm:$0xf]
  %548 = vrot.lane.b32.xlu0 %v523, 32
  %v549 = vpop.permute.xlu0 %548
  %550 = vrot.lane.b32.xlu0 %v524, 32
  %v551 = vpop.permute.xlu0 %550
  %552 = vrot.lane.b32.xlu0 %v525, 32
  %v553 = vpop.permute.xlu0 %552
  %554 = vrot.lane.b32.xlu0 %v526, 32
  %v555 = vpop.permute.xlu0 %554
  %556 = vrot.lane.b32.xlu0 %v527, 32
  %v557 = vpop.permute.xlu0 %556
  %568 = vrot.lane.b32.xlu0 %v528, 64
  %v569 = vpop.permute.xlu0 %568
  %570 = vrot.lane.b32.xlu0 %v529, 64
  %v571 = vpop.permute.xlu0 %570
  %572 = vrot.lane.b32.xlu0 %v530, 64
  %v573 = vpop.permute.xlu0 %572
  %574 = vrot.lane.b32.xlu0 %v531, 64
  %v575 = vpop.permute.xlu0 %574
  %576 = vrot.lane.b32.xlu0 %v532, 64
  %v577 = vpop.permute.xlu0 %576
  %588 = vrot.lane.b32.xlu0 %v533, 96
  %v589 = vpop.permute.xlu0 %588
  %590 = vrot.lane.b32.xlu0 %v534, 96
  %v591 = vpop.permute.xlu0 %590
  %592 = vrot.lane.b32.xlu0 %v535, 96
  %v593 = vpop.permute.xlu0 %592
  %594 = vrot.lane.b32.xlu0 %v536, 96
  %v595 = vpop.permute.xlu0 %594
  %596 = vrot.lane.b32.xlu0 %v537, 96
  %v597 = vpop.permute.xlu0 %596
  %v603 = vsel %vm20, %v518, %v549
  %v604 = vsel %vm20, %v519, %v551
  %v605 = vsel %vm20, %v520, %v553
  %v606 = vsel %vm20, %v521, %v555
  %v607 = vsel %vm20, %v522, %v557
  %v608 = vsel %vm126, %v603, %v569
  %v609 = vsel %vm126, %v604, %v571
  %v610 = vsel %vm126, %v605, %v573
  %v611 = vsel %vm126, %v606, %v575
  %v612 = vsel %vm126, %v607, %v577
  %v613 = vsel %vm132, %v608, %v589
  %v614 = vsel %vm132, %v609, %v591
  %v615 = vsel %vm132, %v610, %v593
  %v616 = vsel %vm132, %v611, %v595
  %v617 = vsel %vm132, %v612, %v597
  %s618 = scalar_lea.vmem %s1, 320
  %v619 = vld [vmem:[%s618] sm:$0xff]
  %v620 = vld [vmem:[%s618 + $0x8] sm:$0xff]
  %v621 = vld [vmem:[%s618 + $0x10] sm:$0xff]
  %v622 = vld [vmem:[%s618 + $0x18] sm:$0xff]
  %v623 = vld [vmem:[%s618 + $0x20] sm:$0xff]
  %v624 = vld [vmem:[%s618 + $0x28] sm:$0xff]
  %v625 = vld [vmem:[%s618 + $0x30] sm:$0xff]
  %v626 = vld [vmem:[%s618 + $0x38] sm:$0xff]
  %v627 = vld [vmem:[%s618 + $0x40] sm:$0xff]
  %v628 = vld [vmem:[%s618 + $0x48] sm:$0xff]
  %v629 = vld [vmem:[%s618 + $0x50] sm:$0xff]
  %v630 = vld [vmem:[%s618 + $0x58] sm:$0xff]
  %v631 = vld [vmem:[%s618 + $0x60] sm:$0xff]
  %v632 = vld [vmem:[%s618 + $0x68] sm:$0xff]
  %v633 = vld [vmem:[%s618 + $0x70] sm:$0xff]
  %v634 = vld [vmem:[%s618 + $0x78] sm:$0xff]
  %v635 = vld [vmem:[%s618 + $0x80] sm:$0xff]
  %v636 = vld [vmem:[%s618 + $0x88] sm:$0xff]
  %v637 = vld [vmem:[%s618 + $0x90] sm:$0xff]
  %v638 = vld [vmem:[%s618 + $0x98] sm:$0xff]
  %s639 = scalar_lea.vmem %s2, 2
  %v640 = vld [vmem:[%s639] sm:$0x1]
  %v642 = vperm.slane %v640, 0
  %v645 = vsel %vm20, %v538, 0
  %v648 = vsel %vm20, %v539, 0
  %v651 = vsel %vm20, %v540, 0
  %v654 = vsel %vm20, %v541, 0
  %v657 = vsel %vm20, %v542, 0
  %659 = vmatpush.msra.mxu0 %v634
  %660 = vmatpush.msra.mxu0 %v633
  %661 = vmatpush.msra.mxu0 %v632
  %662 = vmatpush.msra.mxu0 %v631
  %663 = vmatpush.msra.mxu0 %v630
  %664 = vmatpush.msra.mxu0 %v629
  %665 = vmatpush.msra.mxu0 %v628
  %666 = vmatpush.msra.mxu0 %v627
  %667 = vmatpush.msra.mxu0 %v626
  %668 = vmatpush.msra.mxu0 %v625
  %669 = vmatpush.msra.mxu0 %v624
  %670 = vmatpush.msra.mxu0 %v623
  %671 = vmatpush.msra.mxu0 %v622
  %672 = vmatpush.msra.mxu0 %v621
  %673 = vmatpush.msra.mxu0 %v620
  %674 = vmatpush.msra.mxu0 %v619
  %675 = vmatmul.f32.gmra.mxu0 %v613
  %v676 = vpop.f32.mrf.mxu0
  %v677 = vadd.f32 %v642, %v676
  %678 = vmatmul.f32.gmra.mxu0 %v614
  %v679 = vpop.f32.mrf.mxu0
  %v680 = vadd.f32 %v642, %v679
  %681 = vmatmul.f32.gmra.mxu0 %v615
  %v682 = vpop.f32.mrf.mxu0
  %v683 = vadd.f32 %v642, %v682
  %684 = vmatmul.f32.gmra.mxu0 %v616
  %v685 = vpop.f32.mrf.mxu0
  %v686 = vadd.f32 %v642, %v685
  %687 = vmatmul.f32.gmra.mxu0 %v617
  %v688 = vpop.f32.mrf.mxu0
  %v689 = vadd.f32 %v642, %v688
  %690 = vdwg.mxu0
  %691 = vmatpush.msra.mxu0 0.0
  %692 = vmatpush.msra.mxu0 0.0
  %693 = vmatpush.msra.mxu0 0.0
  %694 = vmatpush.msra.mxu0 0.0
  %695 = vmatpush.msra.mxu0 0.0
  %696 = vmatpush.msra.mxu0 0.0
  %697 = vmatpush.msra.mxu0 0.0
  %698 = vmatpush.msra.mxu0 0.0
  %699 = vmatpush.msra.mxu0 0.0
  %700 = vmatpush.msra.mxu0 0.0
  %701 = vmatpush.msra.mxu0 0.0
  %702 = vmatpush.msra.mxu0 0.0
  %703 = vmatpush.msra.mxu0 %v638
  %704 = vmatpush.msra.mxu0 %v637
  %705 = vmatpush.msra.mxu0 %v636
  %706 = vmatpush.msra.mxu0 %v635
  %707 = vmatmul.f32.gmra.mxu0 %v645
  %v708 = vpop.f32.mrf.mxu0
  %v709 = vadd.f32 %v677, %v708
  %710 = vmatmul.f32.gmra.mxu0 %v648
  %v711 = vpop.f32.mrf.mxu0
  %v712 = vadd.f32 %v680, %v711
  %713 = vmatmul.f32.gmra.mxu0 %v651
  %v714 = vpop.f32.mrf.mxu0
  %v715 = vadd.f32 %v683, %v714
  %716 = vmatmul.f32.gmra.mxu0 %v654
  %v717 = vpop.f32.mrf.mxu0
  %v718 = vadd.f32 %v686, %v717
  %719 = vmatmul.f32.gmra.mxu0 %v657
  %v720 = vpop.f32.mrf.mxu0
  %v721 = vadd.f32 %v689, %v720
  %722 = vdwg.mxu0
  %vm723 = vcmp.gt.f32.partialorder %v709, 0.0
  %vm724 = vcmp.gt.f32.partialorder %v712, 0.0
  %vm725 = vcmp.gt.f32.partialorder %v715, 0.0
  %vm726 = vcmp.gt.f32.partialorder %v718, 0.0
  %vm727 = vcmp.gt.f32.partialorder %v721, 0.0
  %v728 = vmul.f32 %v709, 1.442695
  %v729 = vpow.pop %v728
  %v730 = vmul.f32 %v712, 1.442695
  %v731 = vpow.pop %v730
  %v732 = vmul.f32 %v715, 1.442695
  %v733 = vpow.pop %v732
  %v734 = vmul.f32 %v718, 1.442695
  %v735 = vpow.pop %v734
  %v736 = vmul.f32 %v721, 1.442695
  %v737 = vpow.pop %v736
  %v738 = vsub.f32 %v729, 1.0
  %v739 = vsub.f32 %v731, 1.0
  %v740 = vsub.f32 %v733, 1.0
  %v741 = vsub.f32 %v735, 1.0
  %v742 = vsub.f32 %v737, 1.0
  %v743 = vsel %vm723, %v709, %v738
  %v744 = vsel %vm724, %v712, %v739
  %v745 = vsel %vm725, %v715, %v740
  %v746 = vsel %vm726, %v718, %v741
  %v747 = vsel %vm727, %v721, %v742
  %748 = vst.msk [vmem:[#allocation2 + $0x2] sm:$0xff] %vm20, %v743
  %749 = vst.msk [vmem:[#allocation2 + $0xa] sm:$0xff] %vm20, %v744
  %750 = vst.msk [vmem:[#allocation2 + $0x12] sm:$0xf0] %vm268, %v745
  %751 = vst.msk [vmem:[#allocation2 + $0x1a] sm:$0xff] %vm20, %v746
  %752 = vst.msk [vmem:[#allocation2 + $0x22] sm:$0xf] %vm271, %v747
  %v753 = vld [vmem:[#allocation2] sm:$0xff]
  %v754 = vld [vmem:[#allocation2 + $0x8] sm:$0xff]
  %v755 = vld [vmem:[#allocation2 + $0x10] sm:$0xff]
  %v756 = vld [vmem:[#allocation2 + $0x18] sm:$0xff]
  %v757 = vld [vmem:[#allocation2 + $0x20] sm:$0xf]
  %v758 = vld [vmem:[#allocation2 + $0x1] sm:$0xff]
  %v759 = vld [vmem:[#allocation2 + $0x9] sm:$0xff]
  %v760 = vld [vmem:[#allocation2 + $0x11] sm:$0xff]
  %v761 = vld [vmem:[#allocation2 + $0x19] sm:$0xff]
  %v762 = vld [vmem:[#allocation2 + $0x21] sm:$0xf]
  %v763 = vld [vmem:[#allocation2 + $0x2] sm:$0xff]
  %v764 = vld [vmem:[#allocation2 + $0xa] sm:$0xff]
  %v765 = vld [vmem:[#allocation2 + $0x12] sm:$0xff]
  %v766 = vld [vmem:[#allocation2 + $0x1a] sm:$0xff]
  %v767 = vld [vmem:[#allocation2 + $0x22] sm:$0xf]
  %v768 = vld [vmem:[#allocation2 + $0x3] sm:$0xff]
  %v769 = vld [vmem:[#allocation2 + $0xb] sm:$0xff]
  %v770 = vld [vmem:[#allocation2 + $0x13] sm:$0xff]
  %v771 = vld [vmem:[#allocation2 + $0x1b] sm:$0xff]
  %v772 = vld [vmem:[#allocation2 + $0x23] sm:$0xf]
  %v773 = vld [vmem:[#allocation2 + $0x4] sm:$0xff]
  %v774 = vld [vmem:[#allocation2 + $0xc] sm:$0xff]
  %v775 = vld [vmem:[#allocation2 + $0x14] sm:$0xff]
  %v776 = vld [vmem:[#allocation2 + $0x1c] sm:$0xff]
  %v777 = vld [vmem:[#allocation2 + $0x24] sm:$0xf]
  %783 = vrot.lane.b32.xlu0 %v758, 32
  %v784 = vpop.permute.xlu0 %783
  %785 = vrot.lane.b32.xlu0 %v759, 32
  %v786 = vpop.permute.xlu0 %785
  %787 = vrot.lane.b32.xlu0 %v760, 32
  %v788 = vpop.permute.xlu0 %787
  %789 = vrot.lane.b32.xlu0 %v761, 32
  %v790 = vpop.permute.xlu0 %789
  %791 = vrot.lane.b32.xlu0 %v762, 32
  %v792 = vpop.permute.xlu0 %791
  %803 = vrot.lane.b32.xlu0 %v763, 64
  %v804 = vpop.permute.xlu0 %803
  %805 = vrot.lane.b32.xlu0 %v764, 64
  %v806 = vpop.permute.xlu0 %805
  %807 = vrot.lane.b32.xlu0 %v765, 64
  %v808 = vpop.permute.xlu0 %807
  %809 = vrot.lane.b32.xlu0 %v766, 64
  %v810 = vpop.permute.xlu0 %809
  %811 = vrot.lane.b32.xlu0 %v767, 64
  %v812 = vpop.permute.xlu0 %811
  %823 = vrot.lane.b32.xlu0 %v768, 96
  %v824 = vpop.permute.xlu0 %823
  %825 = vrot.lane.b32.xlu0 %v769, 96
  %v826 = vpop.permute.xlu0 %825
  %827 = vrot.lane.b32.xlu0 %v770, 96
  %v828 = vpop.permute.xlu0 %827
  %829 = vrot.lane.b32.xlu0 %v771, 96
  %v830 = vpop.permute.xlu0 %829
  %831 = vrot.lane.b32.xlu0 %v772, 96
  %v832 = vpop.permute.xlu0 %831
  %v838 = vsel %vm20, %v753, %v784
  %v839 = vsel %vm20, %v754, %v786
  %v840 = vsel %vm20, %v755, %v788
  %v841 = vsel %vm20, %v756, %v790
  %v842 = vsel %vm20, %v757, %v792
  %v843 = vsel %vm126, %v838, %v804
  %v844 = vsel %vm126, %v839, %v806
  %v845 = vsel %vm126, %v840, %v808
  %v846 = vsel %vm126, %v841, %v810
  %v847 = vsel %vm126, %v842, %v812
  %v848 = vsel %vm132, %v843, %v824
  %v849 = vsel %vm132, %v844, %v826
  %v850 = vsel %vm132, %v845, %v828
  %v851 = vsel %vm132, %v846, %v830
  %v852 = vsel %vm132, %v847, %v832
  %s853 = scalar_lea.vmem %s1, 480
  %v854 = vld [vmem:[%s853] sm:$0xff]
  %v855 = vld [vmem:[%s853 + $0x8] sm:$0xff]
  %v856 = vld [vmem:[%s853 + $0x10] sm:$0xff]
  %v857 = vld [vmem:[%s853 + $0x18] sm:$0xff]
  %v858 = vld [vmem:[%s853 + $0x20] sm:$0xff]
  %v859 = vld [vmem:[%s853 + $0x28] sm:$0xff]
  %v860 = vld [vmem:[%s853 + $0x30] sm:$0xff]
  %v861 = vld [vmem:[%s853 + $0x38] sm:$0xff]
  %v862 = vld [vmem:[%s853 + $0x40] sm:$0xff]
  %v863 = vld [vmem:[%s853 + $0x48] sm:$0xff]
  %v864 = vld [vmem:[%s853 + $0x50] sm:$0xff]
  %v865 = vld [vmem:[%s853 + $0x58] sm:$0xff]
  %v866 = vld [vmem:[%s853 + $0x60] sm:$0xff]
  %v867 = vld [vmem:[%s853 + $0x68] sm:$0xff]
  %v868 = vld [vmem:[%s853 + $0x70] sm:$0xff]
  %v869 = vld [vmem:[%s853 + $0x78] sm:$0xff]
  %v870 = vld [vmem:[%s853 + $0x80] sm:$0xff]
  %v871 = vld [vmem:[%s853 + $0x88] sm:$0xff]
  %v872 = vld [vmem:[%s853 + $0x90] sm:$0xff]
  %v873 = vld [vmem:[%s853 + $0x98] sm:$0xff]
  %s874 = scalar_lea.vmem %s2, 3
  %v875 = vld [vmem:[%s874] sm:$0x1]
  %v877 = vperm.slane %v875, 0
  %v880 = vsel %vm20, %v773, 0
  %v883 = vsel %vm20, %v774, 0
  %v886 = vsel %vm20, %v775, 0
  %v889 = vsel %vm20, %v776, 0
  %v892 = vsel %vm20, %v777, 0
  %894 = vmatpush.msra.mxu0 %v869
  %895 = vmatpush.msra.mxu0 %v868
  %896 = vmatpush.msra.mxu0 %v867
  %897 = vmatpush.msra.mxu0 %v866
  %898 = vmatpush.msra.mxu0 %v865
  %899 = vmatpush.msra.mxu0 %v864
  %900 = vmatpush.msra.mxu0 %v863
  %901 = vmatpush.msra.mxu0 %v862
  %902 = vmatpush.msra.mxu0 %v861
  %903 = vmatpush.msra.mxu0 %v860
  %904 = vmatpush.msra.mxu0 %v859
  %905 = vmatpush.msra.mxu0 %v858
  %906 = vmatpush.msra.mxu0 %v857
  %907 = vmatpush.msra.mxu0 %v856
  %908 = vmatpush.msra.mxu0 %v855
  %909 = vmatpush.msra.mxu0 %v854
  %910 = vmatmul.f32.gmra.mxu0 %v848
  %v911 = vpop.f32.mrf.mxu0
  %v912 = vadd.f32 %v877, %v911
  %913 = vmatmul.f32.gmra.mxu0 %v849
  %v914 = vpop.f32.mrf.mxu0
  %v915 = vadd.f32 %v877, %v914
  %916 = vmatmul.f32.gmra.mxu0 %v850
  %v917 = vpop.f32.mrf.mxu0
  %v918 = vadd.f32 %v877, %v917
  %919 = vmatmul.f32.gmra.mxu0 %v851
  %v920 = vpop.f32.mrf.mxu0
  %v921 = vadd.f32 %v877, %v920
  %922 = vmatmul.f32.gmra.mxu0 %v852
  %v923 = vpop.f32.mrf.mxu0
  %v924 = vadd.f32 %v877, %v923
  %925 = vdwg.mxu0
  %926 = vmatpush.msra.mxu0 0.0
  %927 = vmatpush.msra.mxu0 0.0
  %928 = vmatpush.msra.mxu0 0.0
  %929 = vmatpush.msra.mxu0 0.0
  %930 = vmatpush.msra.mxu0 0.0
  %931 = vmatpush.msra.mxu0 0.0
  %932 = vmatpush.msra.mxu0 0.0
  %933 = vmatpush.msra.mxu0 0.0
  %934 = vmatpush.msra.mxu0 0.0
  %935 = vmatpush.msra.mxu0 0.0
  %936 = vmatpush.msra.mxu0 0.0
  %937 = vmatpush.msra.mxu0 0.0
  %938 = vmatpush.msra.mxu0 %v873
  %939 = vmatpush.msra.mxu0 %v872
  %940 = vmatpush.msra.mxu0 %v871
  %941 = vmatpush.msra.mxu0 %v870
  %942 = vmatmul.f32.gmra.mxu0 %v880
  %v943 = vpop.f32.mrf.mxu0
  %v944 = vadd.f32 %v912, %v943
  %945 = vmatmul.f32.gmra.mxu0 %v883
  %v946 = vpop.f32.mrf.mxu0
  %v947 = vadd.f32 %v915, %v946
  %948 = vmatmul.f32.gmra.mxu0 %v886
  %v949 = vpop.f32.mrf.mxu0
  %v950 = vadd.f32 %v918, %v949
  %951 = vmatmul.f32.gmra.mxu0 %v889
  %v952 = vpop.f32.mrf.mxu0
  %v953 = vadd.f32 %v921, %v952
  %954 = vmatmul.f32.gmra.mxu0 %v892
  %v955 = vpop.f32.mrf.mxu0
  %v956 = vadd.f32 %v924, %v955
  %957 = vdwg.mxu0
  %vm958 = vcmp.gt.f32.partialorder %v944, 0.0
  %vm959 = vcmp.gt.f32.partialorder %v947, 0.0
  %vm960 = vcmp.gt.f32.partialorder %v950, 0.0
  %vm961 = vcmp.gt.f32.partialorder %v953, 0.0
  %vm962 = vcmp.gt.f32.partialorder %v956, 0.0
  %v963 = vmul.f32 %v944, 1.442695
  %v964 = vpow.pop %v963
  %v965 = vmul.f32 %v947, 1.442695
  %v966 = vpow.pop %v965
  %v967 = vmul.f32 %v950, 1.442695
  %v968 = vpow.pop %v967
  %v969 = vmul.f32 %v953, 1.442695
  %v970 = vpow.pop %v969
  %v971 = vmul.f32 %v956, 1.442695
  %v972 = vpow.pop %v971
  %v973 = vsub.f32 %v964, 1.0
  %v974 = vsub.f32 %v966, 1.0
  %v975 = vsub.f32 %v968, 1.0
  %v976 = vsub.f32 %v970, 1.0
  %v977 = vsub.f32 %v972, 1.0
  %v978 = vsel %vm958, %v944, %v973
  %v979 = vsel %vm959, %v947, %v974
  %v980 = vsel %vm960, %v950, %v975
  %v981 = vsel %vm961, %v953, %v976
  %v982 = vsel %vm962, %v956, %v977
  %985 = vrot.lane.b32.xlu0 %v978, 32
  %v986 = vpop.permute.xlu0 %985
  %987 = vrot.lane.b32.xlu0 %v979, 32
  %v988 = vpop.permute.xlu0 %987
  %vm991 = vcmask 523520
  %992 = vst.msk [vmem:[#allocation3] sm:$0xff] %vm991, %v986
  %993 = vst.msk [vmem:[#allocation3 + $0x8] sm:$0xff] %vm991, %v988
  %997 = vrot.lane.b32.xlu0 %v980, 32
  %v998 = vpop.permute.xlu0 %997
  %999 = vrot.lane.b32.xlu0 %v981, 32
  %v1000 = vpop.permute.xlu0 %999
  %1001 = vrot.lane.b32.xlu0 %v982, 32
  %v1002 = vpop.permute.xlu0 %1001
  %vm1006 = vcmask 523524
  %1007 = vst.msk [vmem:[#allocation3 + $0xc] sm:$0xf0] %vm1006, %v998
  %1008 = vst.msk [vmem:[#allocation3 + $0x14] sm:$0xff] %vm991, %v1000
  %vm1009 = vcmask 519424
  %1010 = vst.msk [vmem:[#allocation3 + $0x1c] sm:$0xf] %vm1009, %v1002
  %s1011 = scalar_lea.vmem %s0, 64
  %v1012 = vld [vmem:[%s1011] sm:$0xff]
  %v1013 = vld [vmem:[%s1011 + $0x8] sm:$0xff]
  %1014 = vst.msk [vmem:[#allocation2 + $0x2] sm:$0xff] %vm28, %v1012
  %1015 = vst.msk [vmem:[#allocation2 + $0xa] sm:$0xff] %vm28, %v1013
  %s1016 = scalar_lea.vmem %s0, 80
  %v1017 = vld [vmem:[%s1016] sm:$0xff]
  %v1018 = vld [vmem:[%s1016 + $0x8] sm:$0xff]
  %1019 = vst.msk [vmem:[#allocation2 + $0x16] sm:$0xff] %vm28, %v1017
  %1020 = vst.msk [vmem:[#allocation2 + $0x1e] sm:$0xff] %vm28, %v1018
  %v1021 = vld [vmem:[#allocation2] sm:$0xff]
  %v1022 = vld [vmem:[#allocation2 + $0x8] sm:$0xff]
  %v1023 = vld [vmem:[#allocation2 + $0x10] sm:$0xff]
  %v1024 = vld [vmem:[#allocation2 + $0x18] sm:$0xff]
  %v1025 = vld [vmem:[#allocation2 + $0x20] sm:$0xf]
  %v1026 = vld [vmem:[#allocation2 + $0x1] sm:$0xff]
  %v1027 = vld [vmem:[#allocation2 + $0x9] sm:$0xff]
  %v1028 = vld [vmem:[#allocation2 + $0x11] sm:$0xff]
  %v1029 = vld [vmem:[#allocation2 + $0x19] sm:$0xff]
  %v1030 = vld [vmem:[#allocation2 + $0x21] sm:$0xf]
  %v1031 = vld [vmem:[#allocation2 + $0x2] sm:$0xff]
  %v1032 = vld [vmem:[#allocation2 + $0xa] sm:$0xff]
  %v1033 = vld [vmem:[#allocation2 + $0x12] sm:$0xff]
  %v1034 = vld [vmem:[#allocation2 + $0x1a] sm:$0xff]
  %v1035 = vld [vmem:[#allocation2 + $0x22] sm:$0xf]
  %v1036 = vld [vmem:[#allocation2 + $0x3] sm:$0xff]
  %v1037 = vld [vmem:[#allocation2 + $0xb] sm:$0xff]
  %v1038 = vld [vmem:[#allocation2 + $0x13] sm:$0xff]
  %v1039 = vld [vmem:[#allocation2 + $0x1b] sm:$0xff]
  %v1040 = vld [vmem:[#allocation2 + $0x23] sm:$0xf]
  %v1041 = vld [vmem:[#allocation2 + $0x4] sm:$0xff]
  %v1042 = vld [vmem:[#allocation2 + $0xc] sm:$0xff]
  %v1043 = vld [vmem:[#allocation2 + $0x14] sm:$0xff]
  %v1044 = vld [vmem:[#allocation2 + $0x1c] sm:$0xff]
  %v1045 = vld [vmem:[#allocation2 + $0x24] sm:$0xf]
  %1051 = vrot.lane.b32.xlu0 %v1026, 32
  %v1052 = vpop.permute.xlu0 %1051
  %1053 = vrot.lane.b32.xlu0 %v1027, 32
  %v1054 = vpop.permute.xlu0 %1053
  %1055 = vrot.lane.b32.xlu0 %v1028, 32
  %v1056 = vpop.permute.xlu0 %1055
  %1057 = vrot.lane.b32.xlu0 %v1029, 32
  %v1058 = vpop.permute.xlu0 %1057
  %1059 = vrot.lane.b32.xlu0 %v1030, 32
  %v1060 = vpop.permute.xlu0 %1059
  %1071 = vrot.lane.b32.xlu0 %v1031, 64
  %v1072 = vpop.permute.xlu0 %1071
  %1073 = vrot.lane.b32.xlu0 %v1032, 64
  %v1074 = vpop.permute.xlu0 %1073
  %1075 = vrot.lane.b32.xlu0 %v1033, 64
  %v1076 = vpop.permute.xlu0 %1075
  %1077 = vrot.lane.b32.xlu0 %v1034, 64
  %v1078 = vpop.permute.xlu0 %1077
  %1079 = vrot.lane.b32.xlu0 %v1035, 64
  %v1080 = vpop.permute.xlu0 %1079
  %1091 = vrot.lane.b32.xlu0 %v1036, 96
  %v1092 = vpop.permute.xlu0 %1091
  %1093 = vrot.lane.b32.xlu0 %v1037, 96
  %v1094 = vpop.permute.xlu0 %1093
  %1095 = vrot.lane.b32.xlu0 %v1038, 96
  %v1096 = vpop.permute.xlu0 %1095
  %1097 = vrot.lane.b32.xlu0 %v1039, 96
  %v1098 = vpop.permute.xlu0 %1097
  %1099 = vrot.lane.b32.xlu0 %v1040, 96
  %v1100 = vpop.permute.xlu0 %1099
  %v1106 = vsel %vm20, %v1021, %v1052
  %v1107 = vsel %vm20, %v1022, %v1054
  %v1108 = vsel %vm20, %v1023, %v1056
  %v1109 = vsel %vm20, %v1024, %v1058
  %v1110 = vsel %vm20, %v1025, %v1060
  %v1111 = vsel %vm126, %v1106, %v1072
  %v1112 = vsel %vm126, %v1107, %v1074
  %v1113 = vsel %vm126, %v1108, %v1076
  %v1114 = vsel %vm126, %v1109, %v1078
  %v1115 = vsel %vm126, %v1110, %v1080
  %v1116 = vsel %vm132, %v1111, %v1092
  %v1117 = vsel %vm132, %v1112, %v1094
  %v1118 = vsel %vm132, %v1113, %v1096
  %v1119 = vsel %vm132, %v1114, %v1098
  %v1120 = vsel %vm132, %v1115, %v1100
  %s1121 = scalar_lea.vmem %s1, 640
  %v1122 = vld [vmem:[%s1121] sm:$0xff]
  %v1123 = vld [vmem:[%s1121 + $0x8] sm:$0xff]
  %v1124 = vld [vmem:[%s1121 + $0x10] sm:$0xff]
  %v1125 = vld [vmem:[%s1121 + $0x18] sm:$0xff]
  %v1126 = vld [vmem:[%s1121 + $0x20] sm:$0xff]
  %v1127 = vld [vmem:[%s1121 + $0x28] sm:$0xff]
  %v1128 = vld [vmem:[%s1121 + $0x30] sm:$0xff]
  %v1129 = vld [vmem:[%s1121 + $0x38] sm:$0xff]
  %v1130 = vld [vmem:[%s1121 + $0x40] sm:$0xff]
  %v1131 = vld [vmem:[%s1121 + $0x48] sm:$0xff]
  %v1132 = vld [vmem:[%s1121 + $0x50] sm:$0xff]
  %v1133 = vld [vmem:[%s1121 + $0x58] sm:$0xff]
  %v1134 = vld [vmem:[%s1121 + $0x60] sm:$0xff]
  %v1135 = vld [vmem:[%s1121 + $0x68] sm:$0xff]
  %v1136 = vld [vmem:[%s1121 + $0x70] sm:$0xff]
  %v1137 = vld [vmem:[%s1121 + $0x78] sm:$0xff]
  %v1138 = vld [vmem:[%s1121 + $0x80] sm:$0xff]
  %v1139 = vld [vmem:[%s1121 + $0x88] sm:$0xff]
  %v1140 = vld [vmem:[%s1121 + $0x90] sm:$0xff]
  %v1141 = vld [vmem:[%s1121 + $0x98] sm:$0xff]
  %s1142 = scalar_lea.vmem %s2, 4
  %v1143 = vld [vmem:[%s1142] sm:$0x1]
  %v1145 = vperm.slane %v1143, 0
  %v1148 = vsel %vm20, %v1041, 0
  %v1151 = vsel %vm20, %v1042, 0
  %v1154 = vsel %vm20, %v1043, 0
  %v1157 = vsel %vm20, %v1044, 0
  %v1160 = vsel %vm20, %v1045, 0
  %1162 = vmatpush.msra.mxu0 %v1137
  %1163 = vmatpush.msra.mxu0 %v1136
  %1164 = vmatpush.msra.mxu0 %v1135
  %1165 = vmatpush.msra.mxu0 %v1134
  %1166 = vmatpush.msra.mxu0 %v1133
  %1167 = vmatpush.msra.mxu0 %v1132
  %1168 = vmatpush.msra.mxu0 %v1131
  %1169 = vmatpush.msra.mxu0 %v1130
  %1170 = vmatpush.msra.mxu0 %v1129
  %1171 = vmatpush.msra.mxu0 %v1128
  %1172 = vmatpush.msra.mxu0 %v1127
  %1173 = vmatpush.msra.mxu0 %v1126
  %1174 = vmatpush.msra.mxu0 %v1125
  %1175 = vmatpush.msra.mxu0 %v1124
  %1176 = vmatpush.msra.mxu0 %v1123
  %1177 = vmatpush.msra.mxu0 %v1122
  %1178 = vmatmul.f32.gmra.mxu0 %v1116
  %v1179 = vpop.f32.mrf.mxu0
  %v1180 = vadd.f32 %v1145, %v1179
  %1181 = vmatmul.f32.gmra.mxu0 %v1117
  %v1182 = vpop.f32.mrf.mxu0
  %v1183 = vadd.f32 %v1145, %v1182
  %1184 = vmatmul.f32.gmra.mxu0 %v1118
  %v1185 = vpop.f32.mrf.mxu0
  %v1186 = vadd.f32 %v1145, %v1185
  %1187 = vmatmul.f32.gmra.mxu0 %v1119
  %v1188 = vpop.f32.mrf.mxu0
  %v1189 = vadd.f32 %v1145, %v1188
  %1190 = vmatmul.f32.gmra.mxu0 %v1120
  %v1191 = vpop.f32.mrf.mxu0
  %v1192 = vadd.f32 %v1145, %v1191
  %1193 = vdwg.mxu0
  %1194 = vmatpush.msra.mxu0 0.0
  %1195 = vmatpush.msra.mxu0 0.0
  %1196 = vmatpush.msra.mxu0 0.0
  %1197 = vmatpush.msra.mxu0 0.0
  %1198 = vmatpush.msra.mxu0 0.0
  %1199 = vmatpush.msra.mxu0 0.0
  %1200 = vmatpush.msra.mxu0 0.0
  %1201 = vmatpush.msra.mxu0 0.0
  %1202 = vmatpush.msra.mxu0 0.0
  %1203 = vmatpush.msra.mxu0 0.0
  %1204 = vmatpush.msra.mxu0 0.0
  %1205 = vmatpush.msra.mxu0 0.0
  %1206 = vmatpush.msra.mxu0 %v1141
  %1207 = vmatpush.msra.mxu0 %v1140
  %1208 = vmatpush.msra.mxu0 %v1139
  %1209 = vmatpush.msra.mxu0 %v1138
  %1210 = vmatmul.f32.gmra.mxu0 %v1148
  %v1211 = vpop.f32.mrf.mxu0
  %v1212 = vadd.f32 %v1180, %v1211
  %1213 = vmatmul.f32.gmra.mxu0 %v1151
  %v1214 = vpop.f32.mrf.mxu0
  %v1215 = vadd.f32 %v1183, %v1214
  %1216 = vmatmul.f32.gmra.mxu0 %v1154
  %v1217 = vpop.f32.mrf.mxu0
  %v1218 = vadd.f32 %v1186, %v1217
  %1219 = vmatmul.f32.gmra.mxu0 %v1157
  %v1220 = vpop.f32.mrf.mxu0
  %v1221 = vadd.f32 %v1189, %v1220
  %1222 = vmatmul.f32.gmra.mxu0 %v1160
  %v1223 = vpop.f32.mrf.mxu0
  %v1224 = vadd.f32 %v1192, %v1223
  %1225 = vdwg.mxu0
  %vm1226 = vcmp.gt.f32.partialorder %v1212, 0.0
  %vm1227 = vcmp.gt.f32.partialorder %v1215, 0.0
  %vm1228 = vcmp.gt.f32.partialorder %v1218, 0.0
  %vm1229 = vcmp.gt.f32.partialorder %v1221, 0.0
  %vm1230 = vcmp.gt.f32.partialorder %v1224, 0.0
  %v1231 = vmul.f32 %v1212, 1.442695
  %v1232 = vpow.pop %v1231
  %v1233 = vmul.f32 %v1215, 1.442695
  %v1234 = vpow.pop %v1233
  %v1235 = vmul.f32 %v1218, 1.442695
  %v1236 = vpow.pop %v1235
  %v1237 = vmul.f32 %v1221, 1.442695
  %v1238 = vpow.pop %v1237
  %v1239 = vmul.f32 %v1224, 1.442695
  %v1240 = vpow.pop %v1239
  %v1241 = vsub.f32 %v1232, 1.0
  %v1242 = vsub.f32 %v1234, 1.0
  %v1243 = vsub.f32 %v1236, 1.0
  %v1244 = vsub.f32 %v1238, 1.0
  %v1245 = vsub.f32 %v1240, 1.0
  %v1246 = vsel %vm1226, %v1212, %v1241
  %v1247 = vsel %vm1227, %v1215, %v1242
  %v1248 = vsel %vm1228, %v1218, %v1243
  %v1249 = vsel %vm1229, %v1221, %v1244
  %v1250 = vsel %vm1230, %v1224, %v1245
  %1251 = vst.msk [vmem:[#allocation2 + $0x2] sm:$0xff] %vm20, %v1246
  %1252 = vst.msk [vmem:[#allocation2 + $0xa] sm:$0xff] %vm20, %v1247
  %1253 = vst.msk [vmem:[#allocation2 + $0x12] sm:$0xf0] %vm268, %v1248
  %1254 = vst.msk [vmem:[#allocation2 + $0x1a] sm:$0xff] %vm20, %v1249
  %1255 = vst.msk [vmem:[#allocation2 + $0x22] sm:$0xf] %vm271, %v1250
  %v1256 = vld [vmem:[#allocation2] sm:$0xff]
  %v1257 = vld [vmem:[#allocation2 + $0x8] sm:$0xff]
  %v1258 = vld [vmem:[#allocation2 + $0x10] sm:$0xff]
  %v1259 = vld [vmem:[#allocation2 + $0x18] sm:$0xff]
  %v1260 = vld [vmem:[#allocation2 + $0x20] sm:$0xf]
  %v1261 = vld [vmem:[#allocation2 + $0x1] sm:$0xff]
  %v1262 = vld [vmem:[#allocation2 + $0x9] sm:$0xff]
  %v1263 = vld [vmem:[#allocation2 + $0x11] sm:$0xff]
  %v1264 = vld [vmem:[#allocation2 + $0x19] sm:$0xff]
  %v1265 = vld [vmem:[#allocation2 + $0x21] sm:$0xf]
  %v1266 = vld [vmem:[#allocation2 + $0x2] sm:$0xff]
  %v1267 = vld [vmem:[#allocation2 + $0xa] sm:$0xff]
  %v1268 = vld [vmem:[#allocation2 + $0x12] sm:$0xff]
  %v1269 = vld [vmem:[#allocation2 + $0x1a] sm:$0xff]
  %v1270 = vld [vmem:[#allocation2 + $0x22] sm:$0xf]
  %v1271 = vld [vmem:[#allocation2 + $0x3] sm:$0xff]
  %v1272 = vld [vmem:[#allocation2 + $0xb] sm:$0xff]
  %v1273 = vld [vmem:[#allocation2 + $0x13] sm:$0xff]
  %v1274 = vld [vmem:[#allocation2 + $0x1b] sm:$0xff]
  %v1275 = vld [vmem:[#allocation2 + $0x23] sm:$0xf]
  %v1276 = vld [vmem:[#allocation2 + $0x4] sm:$0xff]
  %v1277 = vld [vmem:[#allocation2 + $0xc] sm:$0xff]
  %v1278 = vld [vmem:[#allocation2 + $0x14] sm:$0xff]
  %v1279 = vld [vmem:[#allocation2 + $0x1c] sm:$0xff]
  %v1280 = vld [vmem:[#allocation2 + $0x24] sm:$0xf]
  %1286 = vrot.lane.b32.xlu0 %v1261, 32
  %v1287 = vpop.permute.xlu0 %1286
  %1288 = vrot.lane.b32.xlu0 %v1262, 32
  %v1289 = vpop.permute.xlu0 %1288
  %1290 = vrot.lane.b32.xlu0 %v1263, 32
  %v1291 = vpop.permute.xlu0 %1290
  %1292 = vrot.lane.b32.xlu0 %v1264, 32
  %v1293 = vpop.permute.xlu0 %1292
  %1294 = vrot.lane.b32.xlu0 %v1265, 32
  %v1295 = vpop.permute.xlu0 %1294
  %1306 = vrot.lane.b32.xlu0 %v1266, 64
  %v1307 = vpop.permute.xlu0 %1306
  %1308 = vrot.lane.b32.xlu0 %v1267, 64
  %v1309 = vpop.permute.xlu0 %1308
  %1310 = vrot.lane.b32.xlu0 %v1268, 64
  %v1311 = vpop.permute.xlu0 %1310
  %1312 = vrot.lane.b32.xlu0 %v1269, 64
  %v1313 = vpop.permute.xlu0 %1312
  %1314 = vrot.lane.b32.xlu0 %v1270, 64
  %v1315 = vpop.permute.xlu0 %1314
  %1326 = vrot.lane.b32.xlu0 %v1271, 96
  %v1327 = vpop.permute.xlu0 %1326
  %1328 = vrot.lane.b32.xlu0 %v1272, 96
  %v1329 = vpop.permute.xlu0 %1328
  %1330 = vrot.lane.b32.xlu0 %v1273, 96
  %v1331 = vpop.permute.xlu0 %1330
  %1332 = vrot.lane.b32.xlu0 %v1274, 96
  %v1333 = vpop.permute.xlu0 %1332
  %1334 = vrot.lane.b32.xlu0 %v1275, 96
  %v1335 = vpop.permute.xlu0 %1334
  %v1341 = vsel %vm20, %v1256, %v1287
  %v1342 = vsel %vm20, %v1257, %v1289
  %v1343 = vsel %vm20, %v1258, %v1291
  %v1344 = vsel %vm20, %v1259, %v1293
  %v1345 = vsel %vm20, %v1260, %v1295
  %v1346 = vsel %vm126, %v1341, %v1307
  %v1347 = vsel %vm126, %v1342, %v1309
  %v1348 = vsel %vm126, %v1343, %v1311
  %v1349 = vsel %vm126, %v1344, %v1313
  %v1350 = vsel %vm126, %v1345, %v1315
  %v1351 = vsel %vm132, %v1346, %v1327
  %v1352 = vsel %vm132, %v1347, %v1329
  %v1353 = vsel %vm132, %v1348, %v1331
  %v1354 = vsel %vm132, %v1349, %v1333
  %v1355 = vsel %vm132, %v1350, %v1335
  %s1356 = scalar_lea.vmem %s1, 800
  %v1357 = vld [vmem:[%s1356] sm:$0xff]
  %v1358 = vld [vmem:[%s1356 + $0x8] sm:$0xff]
  %v1359 = vld [vmem:[%s1356 + $0x10] sm:$0xff]
  %v1360 = vld [vmem:[%s1356 + $0x18] sm:$0xff]
  %v1361 = vld [vmem:[%s1356 + $0x20] sm:$0xff]
  %v1362 = vld [vmem:[%s1356 + $0x28] sm:$0xff]
  %v1363 = vld [vmem:[%s1356 + $0x30] sm:$0xff]
  %v1364 = vld [vmem:[%s1356 + $0x38] sm:$0xff]
  %v1365 = vld [vmem:[%s1356 + $0x40] sm:$0xff]
  %v1366 = vld [vmem:[%s1356 + $0x48] sm:$0xff]
  %v1367 = vld [vmem:[%s1356 + $0x50] sm:$0xff]
  %v1368 = vld [vmem:[%s1356 + $0x58] sm:$0xff]
  %v1369 = vld [vmem:[%s1356 + $0x60] sm:$0xff]
  %v1370 = vld [vmem:[%s1356 + $0x68] sm:$0xff]
  %v1371 = vld [vmem:[%s1356 + $0x70] sm:$0xff]
  %v1372 = vld [vmem:[%s1356 + $0x78] sm:$0xff]
  %v1373 = vld [vmem:[%s1356 + $0x80] sm:$0xff]
  %v1374 = vld [vmem:[%s1356 + $0x88] sm:$0xff]
  %v1375 = vld [vmem:[%s1356 + $0x90] sm:$0xff]
  %v1376 = vld [vmem:[%s1356 + $0x98] sm:$0xff]
  %s1377 = scalar_lea.vmem %s2, 5
  %v1378 = vld [vmem:[%s1377] sm:$0x1]
  %v1380 = vperm.slane %v1378, 0
  %v1383 = vsel %vm20, %v1276, 0
  %v1386 = vsel %vm20, %v1277, 0
  %v1389 = vsel %vm20, %v1278, 0
  %v1392 = vsel %vm20, %v1279, 0
  %v1395 = vsel %vm20, %v1280, 0
  %1397 = vmatpush.msra.mxu0 %v1372
  %1398 = vmatpush.msra.mxu0 %v1371
  %1399 = vmatpush.msra.mxu0 %v1370
  %1400 = vmatpush.msra.mxu0 %v1369
  %1401 = vmatpush.msra.mxu0 %v1368
  %1402 = vmatpush.msra.mxu0 %v1367
  %1403 = vmatpush.msra.mxu0 %v1366
  %1404 = vmatpush.msra.mxu0 %v1365
  %1405 = vmatpush.msra.mxu0 %v1364
  %1406 = vmatpush.msra.mxu0 %v1363
  %1407 = vmatpush.msra.mxu0 %v1362
  %1408 = vmatpush.msra.mxu0 %v1361
  %1409 = vmatpush.msra.mxu0 %v1360
  %1410 = vmatpush.msra.mxu0 %v1359
  %1411 = vmatpush.msra.mxu0 %v1358
  %1412 = vmatpush.msra.mxu0 %v1357
  %1413 = vmatmul.f32.gmra.mxu0 %v1351
  %v1414 = vpop.f32.mrf.mxu0
  %v1415 = vadd.f32 %v1380, %v1414
  %1416 = vmatmul.f32.gmra.mxu0 %v1352
  %v1417 = vpop.f32.mrf.mxu0
  %v1418 = vadd.f32 %v1380, %v1417
  %1419 = vmatmul.f32.gmra.mxu0 %v1353
  %v1420 = vpop.f32.mrf.mxu0
  %v1421 = vadd.f32 %v1380, %v1420
  %1422 = vmatmul.f32.gmra.mxu0 %v1354
  %v1423 = vpop.f32.mrf.mxu0
  %v1424 = vadd.f32 %v1380, %v1423
  %1425 = vmatmul.f32.gmra.mxu0 %v1355
  %v1426 = vpop.f32.mrf.mxu0
  %v1427 = vadd.f32 %v1380, %v1426
  %1428 = vdwg.mxu0
  %1429 = vmatpush.msra.mxu0 0.0
  %1430 = vmatpush.msra.mxu0 0.0
  %1431 = vmatpush.msra.mxu0 0.0
  %1432 = vmatpush.msra.mxu0 0.0
  %1433 = vmatpush.msra.mxu0 0.0
  %1434 = vmatpush.msra.mxu0 0.0
  %1435 = vmatpush.msra.mxu0 0.0
  %1436 = vmatpush.msra.mxu0 0.0
  %1437 = vmatpush.msra.mxu0 0.0
  %1438 = vmatpush.msra.mxu0 0.0
  %1439 = vmatpush.msra.mxu0 0.0
  %1440 = vmatpush.msra.mxu0 0.0
  %1441 = vmatpush.msra.mxu0 %v1376
  %1442 = vmatpush.msra.mxu0 %v1375
  %1443 = vmatpush.msra.mxu0 %v1374
  %1444 = vmatpush.msra.mxu0 %v1373
  %1445 = vmatmul.f32.gmra.mxu0 %v1383
  %v1446 = vpop.f32.mrf.mxu0
  %v1447 = vadd.f32 %v1415, %v1446
  %1448 = vmatmul.f32.gmra.mxu0 %v1386
  %v1449 = vpop.f32.mrf.mxu0
  %v1450 = vadd.f32 %v1418, %v1449
  %1451 = vmatmul.f32.gmra.mxu0 %v1389
  %v1452 = vpop.f32.mrf.mxu0
  %v1453 = vadd.f32 %v1421, %v1452
  %1454 = vmatmul.f32.gmra.mxu0 %v1392
  %v1455 = vpop.f32.mrf.mxu0
  %v1456 = vadd.f32 %v1424, %v1455
  %1457 = vmatmul.f32.gmra.mxu0 %v1395
  %v1458 = vpop.f32.mrf.mxu0
  %v1459 = vadd.f32 %v1427, %v1458
  %1460 = vdwg.mxu0
  %vm1461 = vcmp.gt.f32.partialorder %v1447, 0.0
  %vm1462 = vcmp.gt.f32.partialorder %v1450, 0.0
  %vm1463 = vcmp.gt.f32.partialorder %v1453, 0.0
  %vm1464 = vcmp.gt.f32.partialorder %v1456, 0.0
  %vm1465 = vcmp.gt.f32.partialorder %v1459, 0.0
  %v1466 = vmul.f32 %v1447, 1.442695
  %v1467 = vpow.pop %v1466
  %v1468 = vmul.f32 %v1450, 1.442695
  %v1469 = vpow.pop %v1468
  %v1470 = vmul.f32 %v1453, 1.442695
  %v1471 = vpow.pop %v1470
  %v1472 = vmul.f32 %v1456, 1.442695
  %v1473 = vpow.pop %v1472
  %v1474 = vmul.f32 %v1459, 1.442695
  %v1475 = vpow.pop %v1474
  %v1476 = vsub.f32 %v1467, 1.0
  %v1477 = vsub.f32 %v1469, 1.0
  %v1478 = vsub.f32 %v1471, 1.0
  %v1479 = vsub.f32 %v1473, 1.0
  %v1480 = vsub.f32 %v1475, 1.0
  %v1481 = vsel %vm1461, %v1447, %v1476
  %v1482 = vsel %vm1462, %v1450, %v1477
  %v1483 = vsel %vm1463, %v1453, %v1478
  %v1484 = vsel %vm1464, %v1456, %v1479
  %v1485 = vsel %vm1465, %v1459, %v1480
  %1488 = vrot.lane.b32.xlu0 %v1481, 64
  %v1489 = vpop.permute.xlu0 %1488
  %1490 = vrot.lane.b32.xlu0 %v1482, 64
  %v1491 = vpop.permute.xlu0 %1490
  %vm1494 = vcmask 785920
  %1495 = vst.msk [vmem:[#allocation3] sm:$0xff] %vm1494, %v1489
  %1496 = vst.msk [vmem:[#allocation3 + $0x8] sm:$0xff] %vm1494, %v1491
  %1500 = vrot.lane.b32.xlu0 %v1483, 64
  %v1501 = vpop.permute.xlu0 %1500
  %1502 = vrot.lane.b32.xlu0 %v1484, 64
  %v1503 = vpop.permute.xlu0 %1502
  %1504 = vrot.lane.b32.xlu0 %v1485, 64
  %v1505 = vpop.permute.xlu0 %1504
  %vm1509 = vcmask 785924
  %1510 = vst.msk [vmem:[#allocation3 + $0xc] sm:$0xf0] %vm1509, %v1501
  %1511 = vst.msk [vmem:[#allocation3 + $0x14] sm:$0xff] %vm1494, %v1503
  %vm1512 = vcmask 781824
  %1513 = vst.msk [vmem:[#allocation3 + $0x1c] sm:$0xf] %vm1512, %v1505
  %v1514 = vld [vmem:[#allocation3] sm:$0xff]
  %v1515 = vld [vmem:[#allocation3 + $0x8] sm:$0xff]
  %v1516 = vld [vmem:[#allocation3 + $0x10] sm:$0xff]
  %v1517 = vld [vmem:[#allocation3 + $0x18] sm:$0xff]
  %v1518 = vld [vmem:[%s3] sm:$0xff]
  %v1519 = vld [vmem:[%s3 + $0x8] sm:$0xff]
  %v1520 = vld [vmem:[%s3 + $0x10] sm:$0xff]
  %v1521 = vld [vmem:[%s3 + $0x18] sm:$0xff]
  %v1522 = vld [vmem:[%s3 + $0x20] sm:$0xff]
  %v1523 = vld [vmem:[%s3 + $0x28] sm:$0xff]
  %v1524 = vld [vmem:[%s3 + $0x30] sm:$0xff]
  %v1525 = vld [vmem:[%s3 + $0x38] sm:$0xff]
  %v1526 = vld [vmem:[%s3 + $0x40] sm:$0xff]
  %v1527 = vld [vmem:[%s3 + $0x48] sm:$0xff]
  %v1528 = vld [vmem:[%s3 + $0x50] sm:$0xff]
  %v1529 = vld [vmem:[%s3 + $0x58] sm:$0xff]
  %v1530 = vld [vmem:[%s4] sm:$0x1]
  %v1532 = vperm.slane %v1530, 0
  %v1535 = vsel %vm132, %v1514, 0
  %v1538 = vsel %vm132, %v1515, 0
  %v1541 = vsel %vm132, %v1516, 0
  %v1544 = vsel %vm132, %v1517, 0
  %1546 = vmatpush.msra.mxu0 0.0
  %1547 = vmatpush.msra.mxu0 0.0
  %1548 = vmatpush.msra.mxu0 0.0
  %1549 = vmatpush.msra.mxu0 0.0
  %1550 = vmatpush.msra.mxu0 %v1529
  %1551 = vmatpush.msra.mxu0 %v1528
  %1552 = vmatpush.msra.mxu0 %v1527
  %1553 = vmatpush.msra.mxu0 %v1526
  %1554 = vmatpush.msra.mxu0 %v1525
  %1555 = vmatpush.msra.mxu0 %v1524
  %1556 = vmatpush.msra.mxu0 %v1523
  %1557 = vmatpush.msra.mxu0 %v1522
  %1558 = vmatpush.msra.mxu0 %v1521
  %1559 = vmatpush.msra.mxu0 %v1520
  %1560 = vmatpush.msra.mxu0 %v1519
  %1561 = vmatpush.msra.mxu0 %v1518
  %1562 = vmatmul.f32.gmra.mxu0 %v1535
  %v1563 = vpop.f32.mrf.mxu0
  %v1564 = vadd.f32 %v1532, %v1563
  %1565 = vmatmul.f32.gmra.mxu0 %v1538
  %v1566 = vpop.f32.mrf.mxu0
  %v1567 = vadd.f32 %v1532, %v1566
  %1568 = vmatmul.f32.gmra.mxu0 %v1541
  %v1569 = vpop.f32.mrf.mxu0
  %v1570 = vadd.f32 %v1532, %v1569
  %1571 = vmatmul.f32.gmra.mxu0 %v1544
  %v1572 = vpop.f32.mrf.mxu0
  %v1573 = vadd.f32 %v1532, %v1572
  %1574 = vdwg.mxu0
  %vm1575 = vcmp.gt.f32.partialorder %v1564, 0.0
  %vm1576 = vcmp.gt.f32.partialorder %v1567, 0.0
  %vm1577 = vcmp.gt.f32.partialorder %v1570, 0.0
  %vm1578 = vcmp.gt.f32.partialorder %v1573, 0.0
  %v1579 = vmul.f32 %v1564, 1.442695
  %v1580 = vpow.pop %v1579
  %v1581 = vmul.f32 %v1567, 1.442695
  %v1582 = vpow.pop %v1581
  %v1583 = vmul.f32 %v1570, 1.442695
  %v1584 = vpow.pop %v1583
  %v1585 = vmul.f32 %v1573, 1.442695
  %v1586 = vpow.pop %v1585
  %v1587 = vsub.f32 %v1580, 1.0
  %v1588 = vsub.f32 %v1582, 1.0
  %v1589 = vsub.f32 %v1584, 1.0
  %v1590 = vsub.f32 %v1586, 1.0
  %v1591 = vsel %vm1575, %v1564, %v1587
  %v1592 = vsel %vm1576, %v1567, %v1588
  %v1593 = vsel %vm1577, %v1570, %v1589
  %v1594 = vsel %vm1578, %v1573, %v1590
  %s1595 = smul.u32 0, 2
  %s1596 = smul.u32 %s1595, 16
  %s1597 = scalar_lea.vmem %s5, %s1596
  %vm1598 = vcmask 23552
  %1599 = vst.msk [vmem:[%s1597] sm:$0xff] %vm1598, %v1591
  %1600 = vst.msk [vmem:[%s1597 + $0x8] sm:$0xff] %vm1598, %v1592
  %s1601 = sadd.s32 %s1595, 1
  %s1602 = smul.u32 %s1601, 16
  %s1603 = scalar_lea.vmem %s5, %s1602
  %1604 = vst.msk [vmem:[%s1603] sm:$0xff] %vm1598, %v1593
  %1605 = vst.msk [vmem:[%s1603 + $0x8] sm:$0xff] %vm1598, %v1594
  %p1606 = scmp.eq.s32.totalorder 0, 0
  // Predicated region
  $region22: #{enc_forward.1} parent=0 // pred_check
    %p1607 = pneg %p1606
  $region23: #{enc_forward.1} parent=0 // pred_check_branch
    %1609 = sbr.rel (%p1607) target = $region25
  $region24: #{enc_forward.1} parent=0 // pred_region
    %v1610 = vld [vmem:[%s5] sm:$0xff]
    %v1611 = vld [vmem:[%s5 + $0x8] sm:$0xff]
    %v1612 = vld [vmem:[%s5 + $0x10] sm:$0xff]
    %v1613 = vld [vmem:[%s5 + $0x18] sm:$0xff]
    %v1614 = vsel %vm1598, %v1610, 0.0
    %v1615 = vsel %vm1598, %v1611, 0.0
    %v1616 = vadd.f32 %v1614, %v1615
    %v1617 = vsel %vm1598, %v1612, 0.0
    %v1618 = vadd.f32 %v1616, %v1617
    %v1619 = vsel %vm1598, %v1613, 0.0
    %v1620 = vadd.f32 %v1618, %v1619
    %1621 = vadd.xlane.f32.xlu0 %v1620
    %v1622 = vpop.xlane.xlu0 %1621
    %v1623 = vrot.slane %v1622, 4
    %v1624 = vadd.f32 %v1622, %v1623
    %v1625 = vrot.slane %v1624, 2
    %v1626 = vadd.f32 %v1624, %v1625
    %v1627 = vrot.slane %v1626, 1
    %v1628 = vadd.f32 %v1626, %v1627
    %s1629 = vtos %v1628
    %v1630 = vrcp.pop 96.0
    %v1631 = vmul.f32 96.0, %v1630
    %v1632 = vsub.f32 1.0, %v1631
    %v1633 = vmul.f32 %v1630, %v1632
    %v1634 = vadd.f32 %v1630, %v1633
    %vm1635 = vweird.f32 %v1630
    %v1636 = vsel %vm1635, %v1630, %v1634
    %s1637 = vtos %v1636
    %s1638 = smul.f32 %s1629, %s1637
    %v1639 = vstv %s1638
    %v1640 = vsub.f32 %v1610, %v1639
    %v1641 = vsub.f32 %v1611, %v1639
    %v1642 = vsub.f32 %v1612, %v1639
    %v1643 = vsub.f32 %v1613, %v1639
    %v1644 = vmul.f32 %v1640, %v1640
    %v1645 = vmul.f32 %v1641, %v1641
    %v1646 = vmul.f32 %v1642, %v1642
    %v1647 = vmul.f32 %v1643, %v1643
    %v1648 = vsel %vm1598, %v1644, 0.0
    %v1649 = vsel %vm1598, %v1645, 0.0
    %v1650 = vadd.f32 %v1648, %v1649
    %v1651 = vsel %vm1598, %v1646, 0.0
    %v1652 = vadd.f32 %v1650, %v1651
    %v1653 = vsel %vm1598, %v1647, 0.0
    %v1654 = vadd.f32 %v1652, %v1653
    %1655 = vadd.xlane.f32.xlu0 %v1654
    %v1656 = vpop.xlane.xlu0 %1655
    %v1657 = vrot.slane %v1656, 4
    %v1658 = vadd.f32 %v1656, %v1657
    %v1659 = vrot.slane %v1658, 2
    %v1660 = vadd.f32 %v1658, %v1659
    %v1661 = vrot.slane %v1660, 1
    %v1662 = vadd.f32 %v1660, %v1661
    %s1663 = vtos %v1662
    %v1664 = vrcp.pop 95.0
    %v1665 = vmul.f32 95.0, %v1664
    %v1666 = vsub.f32 1.0, %v1665
    %v1667 = vmul.f32 %v1664, %v1666
    %v1668 = vadd.f32 %v1664, %v1667
    %vm1669 = vweird.f32 %v1664
    %v1670 = vsel %vm1669, %v1664, %v1668
    %s1671 = vtos %v1670
    %s1672 = smul.f32 %s1663, %s1671
    %v1673 = vstv %s1672
    %v1674 = vrsqrt.pop %v1673
    %v1675 = vmul.f32 %v1674, %v1673
    %v1676 = vmul.f32 %v1675, %v1674
    %v1677 = vmul.f32 0.5, %v1676
    %v1678 = vsub.f32 1.5, %v1677
    %v1679 = vmul.f32 %v1674, %v1678
    %vm1680 = vweird.f32 %v1673
    %vm1681 = vweird.f32 %v1674
    %vm1682 = vmor %vm1680, %vm1681
    %v1683 = vsel %vm1682, %v1674, %v1679
    %s1684 = vtos %v1683
    %v1685 = vstv %s1684
    %v1686 = vmul.f32 %v1640, %v1685
    %v1687 = vmul.f32 %v1641, %v1685
    %v1688 = vmul.f32 %v1642, %v1685
    %v1689 = vmul.f32 %v1643, %v1685
    %1690 = vst.msk [vmem:[%s5] sm:$0xff] %vm1598, %v1686
    %1691 = vst.msk [vmem:[%s5 + $0x8] sm:$0xff] %vm1598, %v1687
    %1692 = vst.msk [vmem:[%s5 + $0x10] sm:$0xff] %vm1598, %v1688
    %1693 = vst.msk [vmem:[%s5 + $0x18] sm:$0xff] %vm1598, %v1689
  $region25: #{enc_forward.1} parent=0 // pred_fallthru
    _
  // Predicated region
  $region26: #{enc_forward.1} parent=0 // pred_check
    _
  $region27: #{enc_forward.1} parent=0 // pred_check_branch
    %1695 = sbr.rel (0) target = $region29
  $region28: #{enc_forward.1} parent=0 // pred_region
    _
  $region29: #{enc_forward.1} parent=0 // pred_fallthru
    _
  // Predicated region
  $region30: #{enc_forward.1} parent=0 // pred_check
    _
  $region31: #{enc_forward.1} parent=0 // pred_check_branch
    %1697 = sbr.rel (0) target = $region33
  $region32: #{enc_forward.1} parent=0 // pred_region
    _
  $region33: #{enc_forward.1} parent=0 // pred_fallthru
    _

</llo_original>
